<compile_context>
chip_gen: v7x
topology: tpu7x:2x2x1
jax: 0.10.0
libtpu: 0.0.40
codegen_flags: <defaults>
</compile_context>

<pallas_src>
import functools

import jax
import jax.numpy as jnp
from jax.experimental import pallas as pl
from jax.experimental.pallas import tpu as pltpu


def _largest_divisor_leq(n, cap):
    for d in range(min(n, cap), 0, -1):
        if n % d == 0:
            return d
    return 1


# ----------------------------- conv path ------------------------------------


def _conv_kernel(xph_ref, w_ref, b_ref, o_ref, *, h_tile, w_out, c_out):
    """One (batch, output-row-tile) step of the stride-2 3x3 conv.

    xph_ref: [4, Hp, Wp, Cin]  polyphase input for this batch (bf16), resident
    w_ref:   [9, Cin, Cout]    per-tap weights (bf16), resident
    b_ref:   [1, Cout]         bias (f32), resident
    o_ref:   [h_tile, w_out, Cout]
    """
    ho0 = pl.multiple_of(pl.program_id(1) * h_tile, h_tile)

    acc = jnp.zeros((h_tile * w_out, c_out), jnp.float32)
    for kh in range(3):
        for kw in range(3):
            phase = 2 * (kh % 2) + (kw % 2)
            # padded row 2*(ho0+r)+kh == phase (kh%2) at position ho0+r+kh//2
            patch = xph_ref[phase,
                            pl.ds(ho0 + kh // 2, h_tile),
                            pl.ds(kw // 2, w_out),
                            :]                                    # [TH, Wout, Cin]
            patch = patch.reshape(h_tile * w_out, patch.shape[-1])
            acc += jnp.dot(patch, w_ref[kh * 3 + kw],
                           preferred_element_type=jnp.float32)
    acc += b_ref[...].astype(jnp.float32)                         # [1, Cout] broadcast
    o_ref[...] = acc.reshape(h_tile, w_out, c_out).astype(o_ref.dtype)


def _conv_downsample(x, weight, bias, *, compute_dtype=jnp.bfloat16,
                     max_row_tile=64):
    B, C, H, W = x.shape
    C_out = weight.shape[0]
    assert weight.shape == (C_out, C, 3, 3)
    # TODO(synk): odd H/W is also valid for this conv; the polyphase prep below
    # assumes even spatial dims (the usual UNet case).
    assert H % 2 == 0 and W % 2 == 0, "DownsampleBlock kernel assumes even H, W"
    H_out, W_out = H // 2, W // 2
    Hp, Wp = H_out + 1, W_out + 1

    # NCHW -> NHWC (lane-dense channels), zero-pad spatial by 1, polyphase split.
    x_nhwc = jnp.transpose(x, (0, 2, 3, 1))
    x_pad = jnp.pad(x_nhwc, ((0, 0), (1, 1), (1, 1), (0, 0)))
    phases = [x_pad[:, ph::2, pw::2, :] for ph in (0, 1) for pw in (0, 1)]
    x_ph = jnp.stack(phases, axis=1).astype(compute_dtype)        # [B,4,Hp,Wp,C]

    # [Cout, Cin, 3, 3] -> [9, Cin, Cout]: each tap is a ready-to-use MXU rhs.
    w_taps = jnp.transpose(weight, (2, 3, 1, 0)).reshape(9, C, C_out)
    w_taps = w_taps.astype(compute_dtype)
    b_row = bias.reshape(1, C_out).astype(jnp.float32)

    h_tile = _largest_divisor_leq(H_out, max_row_tile)
    grid = (B, H_out // h_tile)

    kernel = functools.partial(_conv_kernel, h_tile=h_tile, w_out=W_out,
                               c_out=C_out)
    out_nhwc = pl.pallas_call(
        kernel,
        out_shape=jax.ShapeDtypeStruct((B, H_out, W_out, C_out), x.dtype),
        grid_spec=pltpu.PrefetchScalarGridSpec(
            num_scalar_prefetch=0,
            grid=grid,
            in_specs=[
                # per-batch polyphase block, resident across the row-tile axis
                pl.BlockSpec((None, 4, Hp, Wp, C), lambda b, h: (b, 0, 0, 0, 0)),
                # weights / bias: constant index map -> stay resident in VMEM
                pl.BlockSpec((9, C, C_out), lambda b, h: (0, 0, 0)),
                pl.BlockSpec((1, C_out), lambda b, h: (0, 0)),
            ],
            out_specs=pl.BlockSpec((None, h_tile, W_out, C_out),
                                   lambda b, h: (b, h, 0, 0)),
        ),
        compiler_params=pltpu.CompilerParams(
            dimension_semantics=("parallel", "parallel")),
        # TODO(synk): for large H*W*C set vmem_limit_bytes per generation
        # (v6e up to ~96 MiB, v7x <= ~48 MiB, v5e ~64 MiB) and shrink
        # max_row_tile so the resident phase block + weights still fit.
    )(x_ph, w_taps, b_row)

    return jnp.transpose(out_nhwc, (0, 3, 1, 2))


# ---------------------------- avg-pool path ---------------------------------


def _avgpool_kernel(xph_ref, o_ref):
    """xph_ref: [4, H_out, W_out, C] phases; o_ref: [H_out, W_out, C]."""
    s = xph_ref[0] + xph_ref[1] + xph_ref[2] + xph_ref[3]
    o_ref[...] = (s * 0.25).astype(o_ref.dtype)


def _avgpool_downsample(x):
    B, C, H, W = x.shape
    assert H % 2 == 0 and W % 2 == 0, "AvgPool2d(2,2) path assumes even H, W"
    H_out, W_out = H // 2, W // 2
    x_nhwc = jnp.transpose(x, (0, 2, 3, 1))
    phases = [x_nhwc[:, ph::2, pw::2, :] for ph in (0, 1) for pw in (0, 1)]
    x_ph = jnp.stack(phases, axis=1)                              # [B,4,Ho,Wo,C]

    out_nhwc = pl.pallas_call(
        _avgpool_kernel,
        out_shape=jax.ShapeDtypeStruct((B, H_out, W_out, C), x.dtype),
        grid_spec=pltpu.PrefetchScalarGridSpec(
            num_scalar_prefetch=0,
            grid=(B,),
            in_specs=[pl.BlockSpec((None, 4, H_out, W_out, C),
                                   lambda b: (b, 0, 0, 0, 0))],
            out_specs=pl.BlockSpec((None, H_out, W_out, C),
                                   lambda b: (b, 0, 0, 0)),
        ),
        compiler_params=pltpu.CompilerParams(
            dimension_semantics=("parallel",)),
    )(x_ph)
    return jnp.transpose(out_nhwc, (0, 3, 1, 2))


# ------------------------------ public API ----------------------------------


def downsample_block(x, params=None, *, use_conv=True):
    """Forward pass of DownsampleBlock. x: [B, C, H, W] (NCHW, like PyTorch)."""
    if use_conv:
        return _conv_downsample(x, params['weight'], params['bias'])
    return _avgpool_downsample(x)


def reference_downsample(x, params=None, *, use_conv=True):
    """Pure-JAX reference mirroring the PyTorch forward."""
    if use_conv:
        y = jax.lax.conv_general_dilated(
            x, params['weight'], window_strides=(2, 2),
            padding=((1, 1), (1, 1)),
            dimension_numbers=('NCHW', 'OIHW', 'NCHW'),
            precision=jax.lax.Precision.HIGHEST)
        return y + params['bias'][None, :, None, None]
    B, C, H, W = x.shape
    return x.reshape(B, C, H // 2, 2, W // 2, 2).mean(axis=(3, 5))


if __name__ == "__main__":
    B, C, H, W = 2, 64, 16, 16

    key = jax.random.PRNGKey(0)
    kx, kw, kb = jax.random.split(key, 3)

    x = jax.random.normal(kx, (B, C, H, W), dtype=jnp.float32)
    fan_in = C * 3 * 3
    bound = 1.0 / (fan_in ** 0.5)
    params = {
        'weight': jax.random.uniform(kw, (C, C, 3, 3), minval=-bound,
                                     maxval=bound, dtype=jnp.float32),
        'bias': jax.random.uniform(kb, (C,), minval=-bound, maxval=bound,
                                   dtype=jnp.float32),
    }

    # --- conv downsample path (use_conv=True, the module default) ---
    out = jax.block_until_ready(downsample_block(x, params, use_conv=True))
    ref = jax.block_until_ready(reference_downsample(x, params, use_conv=True))
    assert out.shape == (B, C, H // 2, W // 2), out.shape
    max_diff = float(jnp.max(jnp.abs(out - ref)))
    assert max_diff < 2e-2, f"conv path mismatch vs reference: {max_diff}"

    # --- avg-pool downsample path (use_conv=False) ---
    out_p = jax.block_until_ready(downsample_block(x, params, use_conv=False))
    ref_p = jax.block_until_ready(reference_downsample(x, params, use_conv=False))
    assert out_p.shape == (B, C, H // 2, W // 2), out_p.shape
    max_diff_p = float(jnp.max(jnp.abs(out_p - ref_p)))
    assert max_diff_p < 1e-4, f"avgpool path mismatch vs reference: {max_diff_p}"

    print("KERNEL_OK")
</pallas_src>

<mosaic_0001>
module attributes {stable_mosaic.version = 11 : i64} {
  func.func @_conv_kernel(%arg0: i32, %arg1: i32, %arg2: memref<1x4x9x9x64xbf16, #tpu.memory_space<vmem>>, %arg3: memref<9x64x64xbf16, #tpu.memory_space<vmem>>, %arg4: memref<1x64xf32, #tpu.memory_space<vmem>>, %arg5: memref<1x8x8x64xf32, #tpu.memory_space<vmem>>) attributes {dimension_semantics = [#tpu.dimension_semantics<parallel>, #tpu.dimension_semantics<parallel>], iteration_bounds = array<i64: 2, 1>, scalar_prefetch = 0 : i64, scratch_operands = 0 : i64, tpu.core_type = #tpu.core_type<tc>, window_params = [{transform_indices = @transform_0, window_bounds = array<i64: 1, 4, 9, 9, 64>}, {pipeline_mode = #tpu.pipeline_mode<synchronous>, transform_indices = @transform_1, window_bounds = array<i64: 9, 64, 64>}, {pipeline_mode = #tpu.pipeline_mode<synchronous>, transform_indices = @transform_2, window_bounds = array<i64: 1, 64>}, {transform_indices = @transform_3, window_bounds = array<i64: 1, 8, 8, 64>}]} {
    %c8_i32 = arith.constant 8 : i32
    %0 = arith.muli %arg1, %c8_i32 : i32
    %1 = tpu.assume_multiple %0, 8 : i32
    %cst = arith.constant 0.000000e+00 : f32
    %2 = vector.broadcast %cst : f32 to vector<64x64xf32>
    %c0_i32 = arith.constant 0 : i32
    %3 = arith.addi %1, %c0_i32 : i32
    %c0 = arith.constant 0 : index
    %c0_0 = arith.constant 0 : index
    %4 = arith.index_cast %3 : i32 to index
    %c0_1 = arith.constant 0 : index
    %c0_2 = arith.constant 0 : index
    %5 = vector.load %arg2[%c0, %c0_0, %4, %c0_1, %c0_2] : memref<1x4x9x9x64xbf16, #tpu.memory_space<vmem>>, vector<1x1x8x8x64xbf16>
    %6 = vector.shape_cast %5 : vector<1x1x8x8x64xbf16> to vector<8x8x64xbf16>
    %7 = vector.shape_cast %6 : vector<8x8x64xbf16> to vector<64x64xbf16>
    %c0_3 = arith.constant 0 : index
    %c0_4 = arith.constant 0 : index
    %c0_5 = arith.constant 0 : index
    %8 = vector.load %arg3[%c0_3, %c0_4, %c0_5] : memref<9x64x64xbf16, #tpu.memory_space<vmem>>, vector<1x64x64xbf16>
    %9 = vector.shape_cast %8 : vector<1x64x64xbf16> to vector<64x64xbf16>
    %cst_6 = arith.constant dense<0.000000e+00> : vector<64x64xf32>
    %10 = tpu.matmul %7, %9, %cst_6 {dimension_numbers = #tpu.dot_dimension_numbers<[1], [0], [0], [1], [0, 0, 1, 1], [], []>} : vector<64x64xbf16>, vector<64x64xbf16>, vector<64x64xf32> -> vector<64x64xf32>
    %11 = arith.addf %2, %10 : vector<64x64xf32>
    %c0_i32_7 = arith.constant 0 : i32
    %12 = arith.addi %1, %c0_i32_7 : i32
    %c0_8 = arith.constant 0 : index
    %c1 = arith.constant 1 : index
    %13 = arith.index_cast %12 : i32 to index
    %c0_9 = arith.constant 0 : index
    %c0_10 = arith.constant 0 : index
    %14 = vector.load %arg2[%c0_8, %c1, %13, %c0_9, %c0_10] : memref<1x4x9x9x64xbf16, #tpu.memory_space<vmem>>, vector<1x1x8x8x64xbf16>
    %15 = vector.shape_cast %14 : vector<1x1x8x8x64xbf16> to vector<8x8x64xbf16>
    %16 = vector.shape_cast %15 : vector<8x8x64xbf16> to vector<64x64xbf16>
    %c1_11 = arith.constant 1 : index
    %c0_12 = arith.constant 0 : index
    %c0_13 = arith.constant 0 : index
    %17 = vector.load %arg3[%c1_11, %c0_12, %c0_13] : memref<9x64x64xbf16, #tpu.memory_space<vmem>>, vector<1x64x64xbf16>
    %18 = vector.shape_cast %17 : vector<1x64x64xbf16> to vector<64x64xbf16>
    %cst_14 = arith.constant dense<0.000000e+00> : vector<64x64xf32>
    %19 = tpu.matmul %16, %18, %cst_14 {dimension_numbers = #tpu.dot_dimension_numbers<[1], [0], [0], [1], [0, 0, 1, 1], [], []>} : vector<64x64xbf16>, vector<64x64xbf16>, vector<64x64xf32> -> vector<64x64xf32>
    %20 = arith.addf %11, %19 : vector<64x64xf32>
    %c0_i32_15 = arith.constant 0 : i32
    %21 = arith.addi %1, %c0_i32_15 : i32
    %c0_16 = arith.constant 0 : index
    %c0_17 = arith.constant 0 : index
    %22 = arith.index_cast %21 : i32 to index
    %c1_18 = arith.constant 1 : index
    %c0_19 = arith.constant 0 : index
    %23 = vector.load %arg2[%c0_16, %c0_17, %22, %c1_18, %c0_19] : memref<1x4x9x9x64xbf16, #tpu.memory_space<vmem>>, vector<1x1x8x8x64xbf16>
    %24 = vector.shape_cast %23 : vector<1x1x8x8x64xbf16> to vector<8x8x64xbf16>
    %25 = vector.shape_cast %24 : vector<8x8x64xbf16> to vector<64x64xbf16>
    %c2 = arith.constant 2 : index
    %c0_20 = arith.constant 0 : index
    %c0_21 = arith.constant 0 : index
    %26 = vector.load %arg3[%c2, %c0_20, %c0_21] : memref<9x64x64xbf16, #tpu.memory_space<vmem>>, vector<1x64x64xbf16>
    %27 = vector.shape_cast %26 : vector<1x64x64xbf16> to vector<64x64xbf16>
    %cst_22 = arith.constant dense<0.000000e+00> : vector<64x64xf32>
    %28 = tpu.matmul %25, %27, %cst_22 {dimension_numbers = #tpu.dot_dimension_numbers<[1], [0], [0], [1], [0, 0, 1, 1], [], []>} : vector<64x64xbf16>, vector<64x64xbf16>, vector<64x64xf32> -> vector<64x64xf32>
    %29 = arith.addf %20, %28 : vector<64x64xf32>
    %c0_i32_23 = arith.constant 0 : i32
    %30 = arith.addi %1, %c0_i32_23 : i32
    %c0_24 = arith.constant 0 : index
    %c2_25 = arith.constant 2 : index
    %31 = arith.index_cast %30 : i32 to index
    %c0_26 = arith.constant 0 : index
    %c0_27 = arith.constant 0 : index
    %32 = vector.load %arg2[%c0_24, %c2_25, %31, %c0_26, %c0_27] : memref<1x4x9x9x64xbf16, #tpu.memory_space<vmem>>, vector<1x1x8x8x64xbf16>
    %33 = vector.shape_cast %32 : vector<1x1x8x8x64xbf16> to vector<8x8x64xbf16>
    %34 = vector.shape_cast %33 : vector<8x8x64xbf16> to vector<64x64xbf16>
    %c3 = arith.constant 3 : index
    %c0_28 = arith.constant 0 : index
    %c0_29 = arith.constant 0 : index
    %35 = vector.load %arg3[%c3, %c0_28, %c0_29] : memref<9x64x64xbf16, #tpu.memory_space<vmem>>, vector<1x64x64xbf16>
    %36 = vector.shape_cast %35 : vector<1x64x64xbf16> to vector<64x64xbf16>
    %cst_30 = arith.constant dense<0.000000e+00> : vector<64x64xf32>
    %37 = tpu.matmul %34, %36, %cst_30 {dimension_numbers = #tpu.dot_dimension_numbers<[1], [0], [0], [1], [0, 0, 1, 1], [], []>} : vector<64x64xbf16>, vector<64x64xbf16>, vector<64x64xf32> -> vector<64x64xf32>
    %38 = arith.addf %29, %37 : vector<64x64xf32>
    %c0_i32_31 = arith.constant 0 : i32
    %39 = arith.addi %1, %c0_i32_31 : i32
    %c0_32 = arith.constant 0 : index
    %c3_33 = arith.constant 3 : index
    %40 = arith.index_cast %39 : i32 to index
    %c0_34 = arith.constant 0 : index
    %c0_35 = arith.constant 0 : index
    %41 = vector.load %arg2[%c0_32, %c3_33, %40, %c0_34, %c0_35] : memref<1x4x9x9x64xbf16, #tpu.memory_space<vmem>>, vector<1x1x8x8x64xbf16>
    %42 = vector.shape_cast %41 : vector<1x1x8x8x64xbf16> to vector<8x8x64xbf16>
    %43 = vector.shape_cast %42 : vector<8x8x64xbf16> to vector<64x64xbf16>
    %c4 = arith.constant 4 : index
    %c0_36 = arith.constant 0 : index
    %c0_37 = arith.constant 0 : index
    %44 = vector.load %arg3[%c4, %c0_36, %c0_37] : memref<9x64x64xbf16, #tpu.memory_space<vmem>>, vector<1x64x64xbf16>
    %45 = vector.shape_cast %44 : vector<1x64x64xbf16> to vector<64x64xbf16>
    %cst_38 = arith.constant dense<0.000000e+00> : vector<64x64xf32>
    %46 = tpu.matmul %43, %45, %cst_38 {dimension_numbers = #tpu.dot_dimension_numbers<[1], [0], [0], [1], [0, 0, 1, 1], [], []>} : vector<64x64xbf16>, vector<64x64xbf16>, vector<64x64xf32> -> vector<64x64xf32>
    %47 = arith.addf %38, %46 : vector<64x64xf32>
    %c0_i32_39 = arith.constant 0 : i32
    %48 = arith.addi %1, %c0_i32_39 : i32
    %c0_40 = arith.constant 0 : index
    %c2_41 = arith.constant 2 : index
    %49 = arith.index_cast %48 : i32 to index
    %c1_42 = arith.constant 1 : index
    %c0_43 = arith.constant 0 : index
    %50 = vector.load %arg2[%c0_40, %c2_41, %49, %c1_42, %c0_43] : memref<1x4x9x9x64xbf16, #tpu.memory_space<vmem>>, vector<1x1x8x8x64xbf16>
    %51 = vector.shape_cast %50 : vector<1x1x8x8x64xbf16> to vector<8x8x64xbf16>
    %52 = vector.shape_cast %51 : vector<8x8x64xbf16> to vector<64x64xbf16>
    %c5 = arith.constant 5 : index
    %c0_44 = arith.constant 0 : index
    %c0_45 = arith.constant 0 : index
    %53 = vector.load %arg3[%c5, %c0_44, %c0_45] : memref<9x64x64xbf16, #tpu.memory_space<vmem>>, vector<1x64x64xbf16>
    %54 = vector.shape_cast %53 : vector<1x64x64xbf16> to vector<64x64xbf16>
    %cst_46 = arith.constant dense<0.000000e+00> : vector<64x64xf32>
    %55 = tpu.matmul %52, %54, %cst_46 {dimension_numbers = #tpu.dot_dimension_numbers<[1], [0], [0], [1], [0, 0, 1, 1], [], []>} : vector<64x64xbf16>, vector<64x64xbf16>, vector<64x64xf32> -> vector<64x64xf32>
    %56 = arith.addf %47, %55 : vector<64x64xf32>
    %c1_i32 = arith.constant 1 : i32
    %57 = arith.addi %1, %c1_i32 : i32
    %c0_47 = arith.constant 0 : index
    %c0_48 = arith.constant 0 : index
    %58 = arith.index_cast %57 : i32 to index
    %c0_49 = arith.constant 0 : index
    %c0_50 = arith.constant 0 : index
    %59 = vector.load %arg2[%c0_47, %c0_48, %58, %c0_49, %c0_50] : memref<1x4x9x9x64xbf16, #tpu.memory_space<vmem>>, vector<1x1x8x8x64xbf16>
    %60 = vector.shape_cast %59 : vector<1x1x8x8x64xbf16> to vector<8x8x64xbf16>
    %61 = vector.shape_cast %60 : vector<8x8x64xbf16> to vector<64x64xbf16>
    %c6 = arith.constant 6 : index
    %c0_51 = arith.constant 0 : index
    %c0_52 = arith.constant 0 : index
    %62 = vector.load %arg3[%c6, %c0_51, %c0_52] : memref<9x64x64xbf16, #tpu.memory_space<vmem>>, vector<1x64x64xbf16>
    %63 = vector.shape_cast %62 : vector<1x64x64xbf16> to vector<64x64xbf16>
    %cst_53 = arith.constant dense<0.000000e+00> : vector<64x64xf32>
    %64 = tpu.matmul %61, %63, %cst_53 {dimension_numbers = #tpu.dot_dimension_numbers<[1], [0], [0], [1], [0, 0, 1, 1], [], []>} : vector<64x64xbf16>, vector<64x64xbf16>, vector<64x64xf32> -> vector<64x64xf32>
    %65 = arith.addf %56, %64 : vector<64x64xf32>
    %c1_i32_54 = arith.constant 1 : i32
    %66 = arith.addi %1, %c1_i32_54 : i32
    %c0_55 = arith.constant 0 : index
    %c1_56 = arith.constant 1 : index
    %67 = arith.index_cast %66 : i32 to index
    %c0_57 = arith.constant 0 : index
    %c0_58 = arith.constant 0 : index
    %68 = vector.load %arg2[%c0_55, %c1_56, %67, %c0_57, %c0_58] : memref<1x4x9x9x64xbf16, #tpu.memory_space<vmem>>, vector<1x1x8x8x64xbf16>
    %69 = vector.shape_cast %68 : vector<1x1x8x8x64xbf16> to vector<8x8x64xbf16>
    %70 = vector.shape_cast %69 : vector<8x8x64xbf16> to vector<64x64xbf16>
    %c7 = arith.constant 7 : index
    %c0_59 = arith.constant 0 : index
    %c0_60 = arith.constant 0 : index
    %71 = vector.load %arg3[%c7, %c0_59, %c0_60] : memref<9x64x64xbf16, #tpu.memory_space<vmem>>, vector<1x64x64xbf16>
    %72 = vector.shape_cast %71 : vector<1x64x64xbf16> to vector<64x64xbf16>
    %cst_61 = arith.constant dense<0.000000e+00> : vector<64x64xf32>
    %73 = tpu.matmul %70, %72, %cst_61 {dimension_numbers = #tpu.dot_dimension_numbers<[1], [0], [0], [1], [0, 0, 1, 1], [], []>} : vector<64x64xbf16>, vector<64x64xbf16>, vector<64x64xf32> -> vector<64x64xf32>
    %74 = arith.addf %65, %73 : vector<64x64xf32>
    %c1_i32_62 = arith.constant 1 : i32
    %75 = arith.addi %1, %c1_i32_62 : i32
    %c0_63 = arith.constant 0 : index
    %c0_64 = arith.constant 0 : index
    %76 = arith.index_cast %75 : i32 to index
    %c1_65 = arith.constant 1 : index
    %c0_66 = arith.constant 0 : index
    %77 = vector.load %arg2[%c0_63, %c0_64, %76, %c1_65, %c0_66] : memref<1x4x9x9x64xbf16, #tpu.memory_space<vmem>>, vector<1x1x8x8x64xbf16>
    %78 = vector.shape_cast %77 : vector<1x1x8x8x64xbf16> to vector<8x8x64xbf16>
    %79 = vector.shape_cast %78 : vector<8x8x64xbf16> to vector<64x64xbf16>
    %c8 = arith.constant 8 : index
    %c0_67 = arith.constant 0 : index
    %c0_68 = arith.constant 0 : index
    %80 = vector.load %arg3[%c8, %c0_67, %c0_68] : memref<9x64x64xbf16, #tpu.memory_space<vmem>>, vector<1x64x64xbf16>
    %81 = vector.shape_cast %80 : vector<1x64x64xbf16> to vector<64x64xbf16>
    %cst_69 = arith.constant dense<0.000000e+00> : vector<64x64xf32>
    %82 = tpu.matmul %79, %81, %cst_69 {dimension_numbers = #tpu.dot_dimension_numbers<[1], [0], [0], [1], [0, 0, 1, 1], [], []>} : vector<64x64xbf16>, vector<64x64xbf16>, vector<64x64xf32> -> vector<64x64xf32>
    %83 = arith.addf %74, %82 : vector<64x64xf32>
    %c0_70 = arith.constant 0 : index
    %c0_71 = arith.constant 0 : index
    %84 = vector.load %arg4[%c0_70, %c0_71] : memref<1x64xf32, #tpu.memory_space<vmem>>, vector<1x64xf32>
    %85 = vector.broadcast %84 : vector<1x64xf32> to vector<64x64xf32>
    %86 = arith.addf %83, %85 : vector<64x64xf32>
    %87 = vector.shape_cast %86 : vector<64x64xf32> to vector<8x8x64xf32>
    %c0_72 = arith.constant 0 : index
    %c0_73 = arith.constant 0 : index
    %c0_74 = arith.constant 0 : index
    %c0_75 = arith.constant 0 : index
    %88 = vector.load %arg5[%c0_72, %c0_73, %c0_74, %c0_75] : memref<1x8x8x64xf32, #tpu.memory_space<vmem>>, vector<1x8x8x64xf32>
    %89 = vector.shape_cast %88 : vector<1x8x8x64xf32> to vector<8x8x64xf32>
    %90 = vector.shape_cast %87 : vector<8x8x64xf32> to vector<1x8x8x64xf32>
    tpu.vector_store %arg5[%c0_72, %c0_73, %c0_74, %c0_75], %90 {strides = array<i32>} : memref<1x8x8x64xf32, #tpu.memory_space<vmem>>, vector<1x8x8x64xf32>,
    return
  }
  func.func @transform_0(%arg0: i32, %arg1: i32) -> (i32, i32, i32, i32, i32) {
    %c0_i32 = arith.constant 0 : i32
    %c0_i32_0 = arith.constant 0 : i32
    %c0_i32_1 = arith.constant 0 : i32
    %c0_i32_2 = arith.constant 0 : i32
    %c0_i32_3 = arith.constant 0 : i32
    return %arg0, %c0_i32, %c0_i32_0, %c0_i32_1, %c0_i32_2 : i32, i32, i32, i32, i32
  }
  func.func @transform_1(%arg0: i32, %arg1: i32) -> (i32, i32, i32) {
    %c0_i32 = arith.constant 0 : i32
    %c0_i32_0 = arith.constant 0 : i32
    %c0_i32_1 = arith.constant 0 : i32
    %c0_i32_2 = arith.constant 0 : i32
    return %c0_i32, %c0_i32_0, %c0_i32_1 : i32, i32, i32
  }
  func.func @transform_2(%arg0: i32, %arg1: i32) -> (i32, i32) {
    %c0_i32 = arith.constant 0 : i32
    %c0_i32_0 = arith.constant 0 : i32
    %c0_i32_1 = arith.constant 0 : i32
    return %c0_i32, %c0_i32_0 : i32, i32
  }
  func.func @transform_3(%arg0: i32, %arg1: i32) -> (i32, i32, i32, i32) {
    %c0_i32 = arith.constant 0 : i32
    %c0_i32_0 = arith.constant 0 : i32
    %c0_i32_1 = arith.constant 0 : i32
    return %arg0, %arg1, %c0_i32, %c0_i32_0 : i32, i32, i32, i32
  }
}

</mosaic_0001>

<llo_original>
// kernel: tpu_custom_call.1
$region0: #{tpu_custom_call.1}
  #allocation0 [shape = 'u32[]', space=smem, size = 0x4, offset = 0x4, fixed_abs, tag = 'smem constant byte address 0x4 - core index']
  #allocation1 [shape = 'u32[144,128]{1,0:T(1,128)}', space=vmem, size = 0x12000, scoped, tag = 'internal scratch']
  %s0 = inlined_call_operand.vmem [shape: bf16[2,4,9,9,64], index: 0, kind: input, shape index: {}]
  %s1 = inlined_call_operand.vmem [shape: bf16[9,64,64], index: 1, kind: input, shape index: {}]
  %s2 = inlined_call_operand.vmem [shape: f32[1,64], index: 2, kind: input, shape index: {}]
  %s3 = inlined_call_operand.hbm [shape: f32[2,8,8,64], index: 3, kind: output, shape index: {}]
  %s4 = sld [smem:[#allocation0]]
  $region45: #{tpu_custom_call.1} parent=0
    _
  %s6 = ssub.s32 1, %s4
  %s7 = scalar_select 0, %s6, %s4
  $region1: #{tpu_custom_call.1} parent=0
    #allocation2 [shape = 'u8[65536]{0}', space=vmem, size = 0x10000, scoped, tag = 'output window, operand 0']
    #allocation3 [shape = 's32[2]{0}', space=sflag, size = 0x8, scoped, tag = 'scoped memory for tpu_custom_call.1']
    %8 = vsyncpa [#allocation3], 0
    %s9 = scalar_lea.sflag [#allocation3], 1
    %10 = vsyncpa %s9, 0
    loop: start=0, step=1, limit=4
    $region2: #{tpu_custom_call.1} parent=1 // loop_pre_header
      _
    $region3: #{tpu_custom_call.1} parent=1 // loop_header
      %s12 = sphi 0, %s16
      %p13 = scmp.ge.s32.totalorder %s12, 4
      %s19 = sphi 0, %s31
      %s20 = sphi 0, %s27
      %s21 = sphi 0, %s19
      %s22 = sphi 0, %s20
      %s23 = sphi 0, %s21
      %s24 = sphi 0, %s22
      %s34 = sphi 0, %s36
      %s37 = sphi 0, %s34
      %s38 = sphi 0, %s37
      %s54 = sphi 0, %s38
      %s58 = sphi 0, %s58
      %s60 = sphi 0, %s58
      %s61 = sphi 0, %s60
      %s75 = sphi 0, %s61
      %s79 = sphi 0, %s79
      %s81 = sphi 0, %s79
      %s82 = sphi 0, %s81
      %s96 = sphi 0, %s82
      %s104 = sphi 0, %s106
      %s107 = sphi 0, %s104
      %s108 = sphi 0, %s107
      %s124 = sphi 0, %s108
    $region4: #{tpu_custom_call.1} parent=1 // loop_header_branch
      %15 = sbr.rel (%p13) target = $region8
    $region5: #{tpu_custom_call.1} parent=1 // loop_body
      %s17 = ssub.s32 %s12, 1
      %s18 = ssub.s32 %s12, 2
      %s25 = sadd.s32 1, %s20
      %p26 = scmp.ge.s32.totalorder %s25, 1
      %s27 = scalar_select %p26, 0, %s25
      %s28 = sadd.s32 1, %s19
      %s29 = scalar_select %p26, %s28, %s19
      %p30 = scmp.ge.s32.totalorder %s29, 2
      %s31 = scalar_select %p30, 0, %s29
      %s32 = ssub.s32 %s19, %s31
      %p33 = scmp.eq.s32.totalorder %s32, 0
      %s35 = sadd.s32 %s34, 1
      %s36 = scalar_select %p33, %s34, %s35
      %p39 = pneg %p33
      %p40 = scmp.eq.s32.totalorder %s12, 1
      %p41 = por %p39, %p40
      %p42 = scmp.ne.s32.totalorder %s34, %s37
      %p43 = scmp.eq.s32.totalorder %s12, 0
      %p44 = por %p42, %p43
      %p45 = scmp.ne.s32.totalorder %s34, %s37
      %p46 = scmp.eq.s32.totalorder %s17, 1
      %p47 = por %p45, %p46
      %p48 = scmp.ne.s32.totalorder %s37, %s38
      %p49 = scmp.eq.s32.totalorder %s17, 0
      %p50 = por %p48, %p49
      %p51 = scmp.ne.s32.totalorder %s37, %s38
      %p52 = scmp.eq.s32.totalorder %s18, 1
      %p53 = por %p51, %p52
      %p55 = scmp.ne.s32.totalorder %s38, %s54
      %p56 = scmp.eq.s32.totalorder %s18, 0
      %p57 = por %p55, %p56
      %s59 = sadd.s32 %s58, 1
      %p62 = scmp.eq.s32.totalorder %s12, 1
      %p63 = scmp.ne.s32.totalorder %s58, %s60
      %p64 = scmp.eq.s32.totalorder %s12, 0
      %p65 = por %p63, %p64
      %p66 = scmp.ne.s32.totalorder %s58, %s60
      %p67 = scmp.eq.s32.totalorder %s17, 1
      %p68 = por %p66, %p67
      %p69 = scmp.ne.s32.totalorder %s60, %s61
      %p70 = scmp.eq.s32.totalorder %s17, 0
      %p71 = por %p69, %p70
      %p72 = scmp.ne.s32.totalorder %s60, %s61
      %p73 = scmp.eq.s32.totalorder %s18, 1
      %p74 = por %p72, %p73
      %p76 = scmp.ne.s32.totalorder %s61, %s75
      %p77 = scmp.eq.s32.totalorder %s18, 0
      %p78 = por %p76, %p77
      %s80 = sadd.s32 %s79, 1
      %p83 = scmp.eq.s32.totalorder %s12, 1
      %p84 = scmp.ne.s32.totalorder %s79, %s81
      %p85 = scmp.eq.s32.totalorder %s12, 0
      %p86 = por %p84, %p85
      %p87 = scmp.ne.s32.totalorder %s79, %s81
      %p88 = scmp.eq.s32.totalorder %s17, 1
      %p89 = por %p87, %p88
      %p90 = scmp.ne.s32.totalorder %s81, %s82
      %p91 = scmp.eq.s32.totalorder %s17, 0
      %p92 = por %p90, %p91
      %p93 = scmp.ne.s32.totalorder %s81, %s82
      %p94 = scmp.eq.s32.totalorder %s18, 1
      %p95 = por %p93, %p94
      %p97 = scmp.ne.s32.totalorder %s82, %s96
      %p98 = scmp.eq.s32.totalorder %s18, 0
      %p99 = por %p97, %p98
      %s100 = ssub.s32 %s19, %s31
      %s101 = ssub.s32 %s20, %s27
      %s102 = sor.u32 %s100, %s101
      %p103 = scmp.eq.s32.totalorder %s102, 0
      %s105 = sadd.s32 %s104, 1
      %s106 = scalar_select %p103, %s104, %s105
      %p109 = pneg %p103
      %p110 = scmp.eq.s32.totalorder %s12, 1
      %p111 = por %p109, %p110
      %p112 = scmp.ne.s32.totalorder %s104, %s107
      %p113 = scmp.eq.s32.totalorder %s12, 0
      %p114 = por %p112, %p113
      %p115 = scmp.ne.s32.totalorder %s104, %s107
      %p116 = scmp.eq.s32.totalorder %s17, 1
      %p117 = por %p115, %p116
      %p118 = scmp.ne.s32.totalorder %s107, %s108
      %p119 = scmp.eq.s32.totalorder %s17, 0
      %p120 = por %p118, %p119
      %p121 = scmp.ne.s32.totalorder %s107, %s108
      %p122 = scmp.eq.s32.totalorder %s18, 1
      %p123 = por %p121, %p122
      %p125 = scmp.ne.s32.totalorder %s108, %s124
      %p126 = scmp.eq.s32.totalorder %s18, 0
      %p127 = por %p125, %p126
      %p128 = scmp.le.s32.totalorder 1, %s12
      %p129 = scmp.lt.s32.totalorder %s12, 3
      %p130 = pnand %p128, %p129
      %p131 = pneg %p130
      // Predicated region
      $region9: #{tpu_custom_call.1} parent=5 // pred_check
        _
      $region10: #{tpu_custom_call.1} parent=5 // pred_check_branch
        %133 = sbr.rel (%p130) target = $region12
      $region11: #{tpu_custom_call.1} parent=5 // pred_region
        %s134 = ssub.s32 %s12, 1
        // Predicated region
        $region13: #{tpu_custom_call.1} parent=11 // pred_check
          %p135 = pneg %p71
        $region14: #{tpu_custom_call.1} parent=11 // pred_check_branch
          %137 = sbr.rel (%p135) target = $region16
        $region15: #{tpu_custom_call.1} parent=11 // pred_region
          _
        $region16: #{tpu_custom_call.1} parent=11 // pred_fallthru
          _
        // Predicated region
        $region17: #{tpu_custom_call.1} parent=11 // pred_check
          %p138 = pneg %p92
        $region18: #{tpu_custom_call.1} parent=11 // pred_check_branch
          %140 = sbr.rel (%p138) target = $region20
        $region19: #{tpu_custom_call.1} parent=11 // pred_region
          _
        $region20: #{tpu_custom_call.1} parent=11 // pred_fallthru
          _
      $region12: #{tpu_custom_call.1} parent=5 // pred_fallthru
        _
      %p141 = scmp.lt.s32.totalorder %s12, 2
      // Predicated region
      $region21: #{tpu_custom_call.1} parent=5 // pred_check
        %p142 = pneg %p141
      $region22: #{tpu_custom_call.1} parent=5 // pred_check_branch
        %144 = sbr.rel (%p142) target = $region24
      $region23: #{tpu_custom_call.1} parent=5 // pred_region
        // Predicated region
        $region25: #{tpu_custom_call.1} parent=23 // pred_check
          %p145 = pneg %p44
        $region26: #{tpu_custom_call.1} parent=23 // pred_check_branch
          %147 = sbr.rel (%p145) target = $region28
        $region27: #{tpu_custom_call.1} parent=23 // pred_region
          %p148 = scmp.lt.s32.totalorder %s19, 1
          %s149 = scalar_select %p148, %s19, 1
          %s150 = smul.addr %s149, 72
          %s151 = smul.addr %s150, 4
          %s152 = scalar_lea.vmem %s0, %s151
        $region28: #{tpu_custom_call.1} parent=23 // pred_fallthru
          _
      $region24: #{tpu_custom_call.1} parent=5 // pred_fallthru
        _
      %p153 = scmp.le.s32.totalorder 1, %s12
      %p154 = scmp.lt.s32.totalorder %s12, 3
      %p155 = pnand %p153, %p154
      %p156 = pneg %p155
      // Predicated region
      $region29: #{tpu_custom_call.1} parent=5 // pred_check
        _
      $region30: #{tpu_custom_call.1} parent=5 // pred_check_branch
        %158 = sbr.rel (%p155) target = $region32
      $region31: #{tpu_custom_call.1} parent=5 // pred_region
        %s159 = ssub.s32 %s12, 1
        %p160 = scmp.lt.s32.totalorder %s21, 1
        %s161 = scalar_select %p160, %s21, 1
        %s162 = smul.addr %s161, 72
        %s163 = smul.addr %s162, 4
        %s164 = scalar_lea.vmem %s0, %s163
        %p165 = pneg %p50
        %p166 = pneg %p47
        %p167 = pneg %p71
        %p168 = pneg %p68
        %p169 = pneg %p92
        %p170 = pneg %p89
        %p171 = pneg %p120
        %p172 = pneg %p117
        %s173 = sand.u32 %s107, 1
        %s174 = scalar_lea.sflag [#allocation3], %s173
        %s175 = sand.u32 %s107, 1
        %s176 = smul.addr %s175, 64
        %s177 = scalar_lea.vmem [#allocation2], %s176
        %p178 = scmp.lt.s32.totalorder %s21, 1
        %s179 = scalar_select %p178, %s21, 1
        %s180 = smul.addr %s179, 72
        %s181 = smul.addr %s180, 4
        %s182 = scalar_lea.vmem %s0, %s181
        %s183 = smul.u32 8, %s22
        %s185 = smul.u32 %s22, 8
        %s186 = smul.u32 %s185, 2
        %s187 = smul.addr %s186, 4
        %s188 = scalar_lea.vmem %s182, %s187
        %v189 = vld [vmem:[%s188] sm:$0xf]
        %v190 = vld [vmem:[%s188 + $0x8] sm:$0xf]
        %v191 = vld [vmem:[%s188 + $0x10] sm:$0xf]
        %v192 = vld [vmem:[%s188 + $0x18] sm:$0xf]
        %v193 = vld [vmem:[%s188 + $0x20] sm:$0xf]
        %v194 = vld [vmem:[%s188 + $0x28] sm:$0xf]
        %v195 = vld [vmem:[%s188 + $0x30] sm:$0xf]
        %v196 = vld [vmem:[%s188 + $0x38] sm:$0xf]
        %v197 = vld [vmem:[%s1] sm:$0xf]
        %v198 = vld [vmem:[%s1 + $0x4] sm:$0xf]
        %v199 = vld [vmem:[%s1 + $0x8] sm:$0xf]
        %v200 = vld [vmem:[%s1 + $0xc] sm:$0xf]
        %v201 = vld [vmem:[%s1 + $0x10] sm:$0xf]
        %v202 = vld [vmem:[%s1 + $0x14] sm:$0xf]
        %v203 = vld [vmem:[%s1 + $0x18] sm:$0xf]
        %v204 = vld [vmem:[%s1 + $0x1c] sm:$0xf]
        %s205 = sadd.s32 %s186, 18
        %s206 = smul.addr %s205, 4
        %s207 = scalar_lea.vmem %s182, %s206
        %v208 = vld [vmem:[%s207] sm:$0xf]
        %v209 = vld [vmem:[%s207 + $0x8] sm:$0xf]
        %v210 = vld [vmem:[%s207 + $0x10] sm:$0xf]
        %v211 = vld [vmem:[%s207 + $0x18] sm:$0xf]
        %v212 = vld [vmem:[%s207 + $0x20] sm:$0xf]
        %v213 = vld [vmem:[%s207 + $0x28] sm:$0xf]
        %v214 = vld [vmem:[%s207 + $0x30] sm:$0xf]
        %v215 = vld [vmem:[%s207 + $0x38] sm:$0xf]
        %s216 = scalar_lea.vmem %s1, 32
        %v217 = vld [vmem:[%s216] sm:$0xf]
        %v218 = vld [vmem:[%s216 + $0x4] sm:$0xf]
        %v219 = vld [vmem:[%s216 + $0x8] sm:$0xf]
        %v220 = vld [vmem:[%s216 + $0xc] sm:$0xf]
        %v221 = vld [vmem:[%s216 + $0x10] sm:$0xf]
        %v222 = vld [vmem:[%s216 + $0x14] sm:$0xf]
        %v223 = vld [vmem:[%s216 + $0x18] sm:$0xf]
        %v224 = vld [vmem:[%s216 + $0x1c] sm:$0xf]
        %v233 = vunpack.c.l.b16 %v208
        %v234 = vunpack.c.l.b16 %v209
        %v235 = vunpack.c.l.b16 %v210
        %v236 = vunpack.c.l.b16 %v211
        %v237 = vunpack.c.l.b16 %v212
        %v238 = vunpack.c.l.b16 %v213
        %v239 = vunpack.c.l.b16 %v214
        %v240 = vunpack.c.l.b16 %v215
        %v241 = vpack.c.b16 %v234, %v233
        %v242 = vpack.c.b16 %v236, %v235
        %v243 = vpack.c.b16 %v238, %v237
        %v244 = vpack.c.b16 %v240, %v239
        %v253 = vunpack.c.l.b16 %v217
        %v254 = vunpack.c.l.b16 %v218
        %v255 = vunpack.c.l.b16 %v219
        %v256 = vunpack.c.l.b16 %v220
        %v257 = vunpack.c.l.b16 %v221
        %v258 = vunpack.c.l.b16 %v222
        %v259 = vunpack.c.l.b16 %v223
        %v260 = vunpack.c.l.b16 %v224
        %v261 = vpack.c.b16 %v254, %v253
        %v262 = vpack.c.b16 %v256, %v255
        %v263 = vpack.c.b16 %v258, %v257
        %v264 = vpack.c.b16 %v260, %v259
        %vm269 = vcmask 523264
        %v271 = vsel %vm269, %v241, 0
        %v274 = vsel %vm269, %v242, 0
        %v277 = vsel %vm269, %v243, 0
        %v280 = vsel %vm269, %v244, 0
        %282 = vmatprep.subr.bf16.mxu0 0
        %283 = vmatpush1.bf16.msra.mxu0 %v261
        %284 = vmatprep.subr.bf16.mxu0 0
        %285 = vmatpush1.bf16.msra.mxu0 %v262
        %286 = vmatprep.subr.bf16.mxu0 0
        %287 = vmatpush1.bf16.msra.mxu0 %v263
        %288 = vmatprep.subr.bf16.mxu0 0
        %289 = vmatpush1.bf16.msra.mxu0 %v264
        %290 = vmatprep.subr.bf16.mxu0 0
        %291 = vmatpush1.bf16.msra.mxu0 0
        %292 = vmatprep.subr.bf16.mxu0 0
        %293 = vmatpush1.bf16.msra.mxu0 0
        %294 = vmatprep.subr.bf16.mxu0 0
        %295 = vmatpush1.bf16.msra.mxu0 0
        %296 = vmatprep.subr.bf16.mxu0 0
        %297 = vmatpush1.bf16.msra.mxu0 0
        %298 = vmatprep.subr.bf16.mxu0 0
        %299 = vmatpush1.bf16.msra.mxu0 0
        %300 = vmatprep.subr.bf16.mxu0 0
        %301 = vmatpush1.bf16.msra.mxu0 0
        %302 = vmatprep.subr.bf16.mxu0 0
        %303 = vmatpush1.bf16.msra.mxu0 0
        %304 = vmatprep.subr.bf16.mxu0 0
        %305 = vmatpush1.bf16.msra.mxu0 0
        %306 = vmatprep.subr.bf16.mxu0 0
        %307 = vmatpush1.bf16.msra.mxu0 0
        %308 = vmatprep.subr.bf16.mxu0 0
        %309 = vmatpush1.bf16.msra.mxu0 0
        %310 = vmatprep.subr.bf16.mxu0 0
        %311 = vmatpush1.bf16.msra.mxu0 0
        %312 = vmatprep.subr.bf16.mxu0 0
        %313 = vmatpush1.bf16.msra.mxu0 0
        %314 = vmatprep.mubr.bf16.mxu0 0
        %315 = vmatmul.mubr.bf16.gmra.mrb[0].mxu0 %v271
        %v316 = vpop.f32.mrb[0].mxu0
        %v317 = vadd.f32 0.0, %v316
        %v318 = vpop.f32.mrb[0].mxu0
        %v319 = vpop.f32.mrb[0].mxu0
        %v320 = vadd.f32 0.0, %v319
        %v321 = vpop.f32.mrb[0].mxu0
        %322 = vmatprep.mubr.bf16.mxu0 0
        %323 = vmatmul.mubr.bf16.gmra.mrb[0].mxu0 %v274
        %v324 = vpop.f32.mrb[0].mxu0
        %v325 = vadd.f32 0.0, %v324
        %v326 = vpop.f32.mrb[0].mxu0
        %v327 = vpop.f32.mrb[0].mxu0
        %v328 = vadd.f32 0.0, %v327
        %v329 = vpop.f32.mrb[0].mxu0
        %330 = vmatprep.mubr.bf16.mxu0 0
        %331 = vmatmul.mubr.bf16.gmra.mrb[0].mxu0 %v277
        %v332 = vpop.f32.mrb[0].mxu0
        %v333 = vadd.f32 0.0, %v332
        %v334 = vpop.f32.mrb[0].mxu0
        %v335 = vpop.f32.mrb[0].mxu0
        %v336 = vadd.f32 0.0, %v335
        %v337 = vpop.f32.mrb[0].mxu0
        %338 = vmatprep.mubr.bf16.mxu0 0
        %339 = vmatmul.mubr.bf16.gmra.mrb[0].mxu0 %v280
        %v340 = vpop.f32.mrb[0].mxu0
        %v341 = vadd.f32 0.0, %v340
        %v342 = vpop.f32.mrb[0].mxu0
        %v343 = vpop.f32.mrb[0].mxu0
        %v344 = vadd.f32 0.0, %v343
        %v345 = vpop.f32.mrb[0].mxu0
        %346 = vdwg.mxu0
        %v355 = vunpack.c.l.b16 %v189
        %v356 = vunpack.c.l.b16 %v190
        %v357 = vunpack.c.l.b16 %v191
        %v358 = vunpack.c.l.b16 %v192
        %v359 = vunpack.c.l.b16 %v193
        %v360 = vunpack.c.l.b16 %v194
        %v361 = vunpack.c.l.b16 %v195
        %v362 = vunpack.c.l.b16 %v196
        %v363 = vpack.c.b16 %v356, %v355
        %v364 = vpack.c.b16 %v358, %v357
        %v365 = vpack.c.b16 %v360, %v359
        %v366 = vpack.c.b16 %v362, %v361
        %v375 = vunpack.c.l.b16 %v197
        %v376 = vunpack.c.l.b16 %v198
        %v377 = vunpack.c.l.b16 %v199
        %v378 = vunpack.c.l.b16 %v200
        %v379 = vunpack.c.l.b16 %v201
        %v380 = vunpack.c.l.b16 %v202
        %v381 = vunpack.c.l.b16 %v203
        %v382 = vunpack.c.l.b16 %v204
        %v383 = vpack.c.b16 %v376, %v375
        %v384 = vpack.c.b16 %v378, %v377
        %v385 = vpack.c.b16 %v380, %v379
        %v386 = vpack.c.b16 %v382, %v381
        %v392 = vsel %vm269, %v363, 0
        %v395 = vsel %vm269, %v364, 0
        %v398 = vsel %vm269, %v365, 0
        %v401 = vsel %vm269, %v366, 0
        %403 = vmatprep.subr.bf16.mxu0 0
        %404 = vmatpush1.bf16.msra.mxu0 %v383
        %405 = vmatprep.subr.bf16.mxu0 0
        %406 = vmatpush1.bf16.msra.mxu0 %v384
        %407 = vmatprep.subr.bf16.mxu0 0
        %408 = vmatpush1.bf16.msra.mxu0 %v385
        %409 = vmatprep.subr.bf16.mxu0 0
        %410 = vmatpush1.bf16.msra.mxu0 %v386
        %411 = vmatprep.subr.bf16.mxu0 0
        %412 = vmatpush1.bf16.msra.mxu0 0
        %413 = vmatprep.subr.bf16.mxu0 0
        %414 = vmatpush1.bf16.msra.mxu0 0
        %415 = vmatprep.subr.bf16.mxu0 0
        %416 = vmatpush1.bf16.msra.mxu0 0
        %417 = vmatprep.subr.bf16.mxu0 0
        %418 = vmatpush1.bf16.msra.mxu0 0
        %419 = vmatprep.subr.bf16.mxu0 0
        %420 = vmatpush1.bf16.msra.mxu0 0
        %421 = vmatprep.subr.bf16.mxu0 0
        %422 = vmatpush1.bf16.msra.mxu0 0
        %423 = vmatprep.subr.bf16.mxu0 0
        %424 = vmatpush1.bf16.msra.mxu0 0
        %425 = vmatprep.subr.bf16.mxu0 0
        %426 = vmatpush1.bf16.msra.mxu0 0
        %427 = vmatprep.subr.bf16.mxu0 0
        %428 = vmatpush1.bf16.msra.mxu0 0
        %429 = vmatprep.subr.bf16.mxu0 0
        %430 = vmatpush1.bf16.msra.mxu0 0
        %431 = vmatprep.subr.bf16.mxu0 0
        %432 = vmatpush1.bf16.msra.mxu0 0
        %433 = vmatprep.subr.bf16.mxu0 0
        %434 = vmatpush1.bf16.msra.mxu0 0
        %435 = vmatprep.mubr.bf16.mxu0 0
        %436 = vmatmul.mubr.bf16.gmra.mrb[0].mxu0 %v392
        %v437 = vpop.f32.mrb[0].mxu0
        %v438 = vadd.f32 %v317, %v437
        %v439 = vpop.f32.mrb[0].mxu0
        %v440 = vpop.f32.mrb[0].mxu0
        %v441 = vadd.f32 %v320, %v440
        %v442 = vpop.f32.mrb[0].mxu0
        %443 = vmatprep.mubr.bf16.mxu0 0
        %444 = vmatmul.mubr.bf16.gmra.mrb[0].mxu0 %v395
        %v445 = vpop.f32.mrb[0].mxu0
        %v446 = vadd.f32 %v325, %v445
        %v447 = vpop.f32.mrb[0].mxu0
        %v448 = vpop.f32.mrb[0].mxu0
        %v449 = vadd.f32 %v328, %v448
        %v450 = vpop.f32.mrb[0].mxu0
        %451 = vmatprep.mubr.bf16.mxu0 0
        %452 = vmatmul.mubr.bf16.gmra.mrb[0].mxu0 %v398
        %v453 = vpop.f32.mrb[0].mxu0
        %v454 = vadd.f32 %v333, %v453
        %v455 = vpop.f32.mrb[0].mxu0
        %v456 = vpop.f32.mrb[0].mxu0
        %v457 = vadd.f32 %v336, %v456
        %v458 = vpop.f32.mrb[0].mxu0
        %459 = vmatprep.mubr.bf16.mxu0 0
        %460 = vmatmul.mubr.bf16.gmra.mrb[0].mxu0 %v401
        %v461 = vpop.f32.mrb[0].mxu0
        %v462 = vadd.f32 %v341, %v461
        %v463 = vpop.f32.mrb[0].mxu0
        %v464 = vpop.f32.mrb[0].mxu0
        %v465 = vadd.f32 %v344, %v464
        %v466 = vpop.f32.mrb[0].mxu0
        %467 = vdwg.mxu0
        %v468 = vld [vmem:[%s188] sm:$0xf]
        %v469 = vld [vmem:[%s188 + $0x4] sm:$0x1]
        %v470 = vld [vmem:[%s188 + $0x8] sm:$0xf]
        %v471 = vld [vmem:[%s188 + $0xc] sm:$0x1]
        %v472 = vld [vmem:[%s188 + $0x10] sm:$0xf]
        %v473 = vld [vmem:[%s188 + $0x14] sm:$0x1]
        %v474 = vld [vmem:[%s188 + $0x18] sm:$0xf]
        %v475 = vld [vmem:[%s188 + $0x1c] sm:$0x1]
        %v476 = vld [vmem:[%s188 + $0x20] sm:$0xf]
        %v477 = vld [vmem:[%s188 + $0x24] sm:$0x1]
        %v478 = vld [vmem:[%s188 + $0x28] sm:$0xf]
        %v479 = vld [vmem:[%s188 + $0x2c] sm:$0x1]
        %v480 = vld [vmem:[%s188 + $0x30] sm:$0xf]
        %v481 = vld [vmem:[%s188 + $0x34] sm:$0x1]
        %v482 = vld [vmem:[%s188 + $0x38] sm:$0xf]
        %v483 = vld [vmem:[%s188 + $0x3c] sm:$0x1]
        %vm484 = vsmask.f32 3328
        %vm485 = vsmask.f32 7440
        %vm486 = vmor %vm484, %vm485
        %v488 = vshrl.u32 %v468, 16
        %v490 = vrot.slane %v488, 4
        %v491 = vshll.u32 %v468, 16
        %v493 = vrot.slane %v491, 5
        %v494 = vor.u32 %v490, %v493
        %v495 = vrot.slane %v494, 4
        %v497 = vshll.u32 %v469, 16
        %v499 = vrot.slane %v497, 5
        %v500 = vsel %vm486, %v495, %v499
        %v502 = vshrl.u32 %v470, 16
        %v504 = vrot.slane %v502, 4
        %v505 = vshll.u32 %v470, 16
        %v507 = vrot.slane %v505, 5
        %v508 = vor.u32 %v504, %v507
        %v509 = vrot.slane %v508, 4
        %v511 = vshll.u32 %v471, 16
        %v513 = vrot.slane %v511, 5
        %v514 = vsel %vm486, %v509, %v513
        %v516 = vshrl.u32 %v472, 16
        %v518 = vrot.slane %v516, 4
        %v519 = vshll.u32 %v472, 16
        %v521 = vrot.slane %v519, 5
        %v522 = vor.u32 %v518, %v521
        %v523 = vrot.slane %v522, 4
        %v525 = vshll.u32 %v473, 16
        %v527 = vrot.slane %v525, 5
        %v528 = vsel %vm486, %v523, %v527
        %v530 = vshrl.u32 %v474, 16
        %v532 = vrot.slane %v530, 4
        %v533 = vshll.u32 %v474, 16
        %v535 = vrot.slane %v533, 5
        %v536 = vor.u32 %v532, %v535
        %v537 = vrot.slane %v536, 4
        %v539 = vshll.u32 %v475, 16
        %v541 = vrot.slane %v539, 5
        %v542 = vsel %vm486, %v537, %v541
        %v544 = vshrl.u32 %v476, 16
        %v546 = vrot.slane %v544, 4
        %v547 = vshll.u32 %v476, 16
        %v549 = vrot.slane %v547, 5
        %v550 = vor.u32 %v546, %v549
        %v551 = vrot.slane %v550, 4
        %v553 = vshll.u32 %v477, 16
        %v555 = vrot.slane %v553, 5
        %v556 = vsel %vm486, %v551, %v555
        %v558 = vshrl.u32 %v478, 16
        %v560 = vrot.slane %v558, 4
        %v561 = vshll.u32 %v478, 16
        %v563 = vrot.slane %v561, 5
        %v564 = vor.u32 %v560, %v563
        %v565 = vrot.slane %v564, 4
        %v567 = vshll.u32 %v479, 16
        %v569 = vrot.slane %v567, 5
        %v570 = vsel %vm486, %v565, %v569
        %v572 = vshrl.u32 %v480, 16
        %v574 = vrot.slane %v572, 4
        %v575 = vshll.u32 %v480, 16
        %v577 = vrot.slane %v575, 5
        %v578 = vor.u32 %v574, %v577
        %v579 = vrot.slane %v578, 4
        %v581 = vshll.u32 %v481, 16
        %v583 = vrot.slane %v581, 5
        %v584 = vsel %vm486, %v579, %v583
        %v586 = vshrl.u32 %v482, 16
        %v588 = vrot.slane %v586, 4
        %v589 = vshll.u32 %v482, 16
        %v591 = vrot.slane %v589, 5
        %v592 = vor.u32 %v588, %v591
        %v593 = vrot.slane %v592, 4
        %v595 = vshll.u32 %v483, 16
        %v597 = vrot.slane %v595, 5
        %v598 = vsel %vm486, %v593, %v597
        %s599 = scalar_lea.vmem %s1, 64
        %v600 = vld [vmem:[%s599] sm:$0xf]
        %v601 = vld [vmem:[%s599 + $0x4] sm:$0xf]
        %v602 = vld [vmem:[%s599 + $0x8] sm:$0xf]
        %v603 = vld [vmem:[%s599 + $0xc] sm:$0xf]
        %v604 = vld [vmem:[%s599 + $0x10] sm:$0xf]
        %v605 = vld [vmem:[%s599 + $0x14] sm:$0xf]
        %v606 = vld [vmem:[%s599 + $0x18] sm:$0xf]
        %v607 = vld [vmem:[%s599 + $0x1c] sm:$0xf]
        %v608 = vunpack.c.l.b16 %v500
        %v609 = vunpack.c.l.b16 %v514
        %v610 = vunpack.c.l.b16 %v528
        %v611 = vunpack.c.l.b16 %v542
        %v612 = vunpack.c.l.b16 %v556
        %v613 = vunpack.c.l.b16 %v570
        %v614 = vunpack.c.l.b16 %v584
        %v615 = vunpack.c.l.b16 %v598
        %v616 = vpack.c.b16 %v609, %v608
        %v617 = vpack.c.b16 %v611, %v610
        %v618 = vpack.c.b16 %v613, %v612
        %v619 = vpack.c.b16 %v615, %v614
        %v628 = vunpack.c.l.b16 %v600
        %v629 = vunpack.c.l.b16 %v601
        %v630 = vunpack.c.l.b16 %v602
        %v631 = vunpack.c.l.b16 %v603
        %v632 = vunpack.c.l.b16 %v604
        %v633 = vunpack.c.l.b16 %v605
        %v634 = vunpack.c.l.b16 %v606
        %v635 = vunpack.c.l.b16 %v607
        %v636 = vpack.c.b16 %v629, %v628
        %v637 = vpack.c.b16 %v631, %v630
        %v638 = vpack.c.b16 %v633, %v632
        %v639 = vpack.c.b16 %v635, %v634
        %v645 = vsel %vm269, %v616, 0
        %v648 = vsel %vm269, %v617, 0
        %v651 = vsel %vm269, %v618, 0
        %v654 = vsel %vm269, %v619, 0
        %656 = vmatprep.subr.bf16.mxu0 0
        %657 = vmatpush1.bf16.msra.mxu0 %v636
        %658 = vmatprep.subr.bf16.mxu0 0
        %659 = vmatpush1.bf16.msra.mxu0 %v637
        %660 = vmatprep.subr.bf16.mxu0 0
        %661 = vmatpush1.bf16.msra.mxu0 %v638
        %662 = vmatprep.subr.bf16.mxu0 0
        %663 = vmatpush1.bf16.msra.mxu0 %v639
        %664 = vmatprep.subr.bf16.mxu0 0
        %665 = vmatpush1.bf16.msra.mxu0 0
        %666 = vmatprep.subr.bf16.mxu0 0
        %667 = vmatpush1.bf16.msra.mxu0 0
        %668 = vmatprep.subr.bf16.mxu0 0
        %669 = vmatpush1.bf16.msra.mxu0 0
        %670 = vmatprep.subr.bf16.mxu0 0
        %671 = vmatpush1.bf16.msra.mxu0 0
        %672 = vmatprep.subr.bf16.mxu0 0
        %673 = vmatpush1.bf16.msra.mxu0 0
        %674 = vmatprep.subr.bf16.mxu0 0
        %675 = vmatpush1.bf16.msra.mxu0 0
        %676 = vmatprep.subr.bf16.mxu0 0
        %677 = vmatpush1.bf16.msra.mxu0 0
        %678 = vmatprep.subr.bf16.mxu0 0
        %679 = vmatpush1.bf16.msra.mxu0 0
        %680 = vmatprep.subr.bf16.mxu0 0
        %681 = vmatpush1.bf16.msra.mxu0 0
        %682 = vmatprep.subr.bf16.mxu0 0
        %683 = vmatpush1.bf16.msra.mxu0 0
        %684 = vmatprep.subr.bf16.mxu0 0
        %685 = vmatpush1.bf16.msra.mxu0 0
        %686 = vmatprep.subr.bf16.mxu0 0
        %687 = vmatpush1.bf16.msra.mxu0 0
        %688 = vmatprep.mubr.bf16.mxu0 0
        %689 = vmatmul.mubr.bf16.gmra.mrb[0].mxu0 %v645
        %v690 = vpop.f32.mrb[0].mxu0
        %v691 = vadd.f32 0.0, %v690
        %v692 = vpop.f32.mrb[0].mxu0
        %v693 = vpop.f32.mrb[0].mxu0
        %v694 = vadd.f32 0.0, %v693
        %v695 = vpop.f32.mrb[0].mxu0
        %696 = vmatprep.mubr.bf16.mxu0 0
        %697 = vmatmul.mubr.bf16.gmra.mrb[0].mxu0 %v648
        %v698 = vpop.f32.mrb[0].mxu0
        %v699 = vadd.f32 0.0, %v698
        %v700 = vpop.f32.mrb[0].mxu0
        %v701 = vpop.f32.mrb[0].mxu0
        %v702 = vadd.f32 0.0, %v701
        %v703 = vpop.f32.mrb[0].mxu0
        %704 = vmatprep.mubr.bf16.mxu0 0
        %705 = vmatmul.mubr.bf16.gmra.mrb[0].mxu0 %v651
        %v706 = vpop.f32.mrb[0].mxu0
        %v707 = vadd.f32 0.0, %v706
        %v708 = vpop.f32.mrb[0].mxu0
        %v709 = vpop.f32.mrb[0].mxu0
        %v710 = vadd.f32 0.0, %v709
        %v711 = vpop.f32.mrb[0].mxu0
        %712 = vmatprep.mubr.bf16.mxu0 0
        %713 = vmatmul.mubr.bf16.gmra.mrb[0].mxu0 %v654
        %v714 = vpop.f32.mrb[0].mxu0
        %v715 = vadd.f32 0.0, %v714
        %v716 = vpop.f32.mrb[0].mxu0
        %v717 = vpop.f32.mrb[0].mxu0
        %v718 = vadd.f32 0.0, %v717
        %v719 = vpop.f32.mrb[0].mxu0
        %720 = vdwg.mxu0
        %v721 = vadd.f32 %v438, %v691
        %v722 = vadd.f32 %v441, %v694
        %v723 = vadd.f32 %v446, %v699
        %v724 = vadd.f32 %v449, %v702
        %v725 = vadd.f32 %v454, %v707
        %v726 = vadd.f32 %v457, %v710
        %v727 = vadd.f32 %v462, %v715
        %v728 = vadd.f32 %v465, %v718
        %s729 = sadd.s32 %s186, 36
        %s730 = smul.addr %s729, 4
        %s731 = scalar_lea.vmem %s182, %s730
        %v732 = vld [vmem:[%s731] sm:$0xf]
        %v733 = vld [vmem:[%s731 + $0x8] sm:$0xf]
        %v734 = vld [vmem:[%s731 + $0x10] sm:$0xf]
        %v735 = vld [vmem:[%s731 + $0x18] sm:$0xf]
        %v736 = vld [vmem:[%s731 + $0x20] sm:$0xf]
        %v737 = vld [vmem:[%s731 + $0x28] sm:$0xf]
        %v738 = vld [vmem:[%s731 + $0x30] sm:$0xf]
        %v739 = vld [vmem:[%s731 + $0x38] sm:$0xf]
        %s740 = scalar_lea.vmem %s1, 96
        %v741 = vld [vmem:[%s740] sm:$0xf]
        %v742 = vld [vmem:[%s740 + $0x4] sm:$0xf]
        %v743 = vld [vmem:[%s740 + $0x8] sm:$0xf]
        %v744 = vld [vmem:[%s740 + $0xc] sm:$0xf]
        %v745 = vld [vmem:[%s740 + $0x10] sm:$0xf]
        %v746 = vld [vmem:[%s740 + $0x14] sm:$0xf]
        %v747 = vld [vmem:[%s740 + $0x18] sm:$0xf]
        %v748 = vld [vmem:[%s740 + $0x1c] sm:$0xf]
        %v757 = vunpack.c.l.b16 %v732
        %v758 = vunpack.c.l.b16 %v733
        %v759 = vunpack.c.l.b16 %v734
        %v760 = vunpack.c.l.b16 %v735
        %v761 = vunpack.c.l.b16 %v736
        %v762 = vunpack.c.l.b16 %v737
        %v763 = vunpack.c.l.b16 %v738
        %v764 = vunpack.c.l.b16 %v739
        %v765 = vpack.c.b16 %v758, %v757
        %v766 = vpack.c.b16 %v760, %v759
        %v767 = vpack.c.b16 %v762, %v761
        %v768 = vpack.c.b16 %v764, %v763
        %v777 = vunpack.c.l.b16 %v741
        %v778 = vunpack.c.l.b16 %v742
        %v779 = vunpack.c.l.b16 %v743
        %v780 = vunpack.c.l.b16 %v744
        %v781 = vunpack.c.l.b16 %v745
        %v782 = vunpack.c.l.b16 %v746
        %v783 = vunpack.c.l.b16 %v747
        %v784 = vunpack.c.l.b16 %v748
        %v785 = vpack.c.b16 %v778, %v777
        %v786 = vpack.c.b16 %v780, %v779
        %v787 = vpack.c.b16 %v782, %v781
        %v788 = vpack.c.b16 %v784, %v783
        %v794 = vsel %vm269, %v765, 0
        %v797 = vsel %vm269, %v766, 0
        %v800 = vsel %vm269, %v767, 0
        %v803 = vsel %vm269, %v768, 0
        %805 = vmatprep.subr.bf16.mxu0 0
        %806 = vmatpush1.bf16.msra.mxu0 %v785
        %807 = vmatprep.subr.bf16.mxu0 0
        %808 = vmatpush1.bf16.msra.mxu0 %v786
        %809 = vmatprep.subr.bf16.mxu0 0
        %810 = vmatpush1.bf16.msra.mxu0 %v787
        %811 = vmatprep.subr.bf16.mxu0 0
        %812 = vmatpush1.bf16.msra.mxu0 %v788
        %813 = vmatprep.subr.bf16.mxu0 0
        %814 = vmatpush1.bf16.msra.mxu0 0
        %815 = vmatprep.subr.bf16.mxu0 0
        %816 = vmatpush1.bf16.msra.mxu0 0
        %817 = vmatprep.subr.bf16.mxu0 0
        %818 = vmatpush1.bf16.msra.mxu0 0
        %819 = vmatprep.subr.bf16.mxu0 0
        %820 = vmatpush1.bf16.msra.mxu0 0
        %821 = vmatprep.subr.bf16.mxu0 0
        %822 = vmatpush1.bf16.msra.mxu0 0
        %823 = vmatprep.subr.bf16.mxu0 0
        %824 = vmatpush1.bf16.msra.mxu0 0
        %825 = vmatprep.subr.bf16.mxu0 0
        %826 = vmatpush1.bf16.msra.mxu0 0
        %827 = vmatprep.subr.bf16.mxu0 0
        %828 = vmatpush1.bf16.msra.mxu0 0
        %829 = vmatprep.subr.bf16.mxu0 0
        %830 = vmatpush1.bf16.msra.mxu0 0
        %831 = vmatprep.subr.bf16.mxu0 0
        %832 = vmatpush1.bf16.msra.mxu0 0
        %833 = vmatprep.subr.bf16.mxu0 0
        %834 = vmatpush1.bf16.msra.mxu0 0
        %835 = vmatprep.subr.bf16.mxu0 0
        %836 = vmatpush1.bf16.msra.mxu0 0
        %837 = vmatprep.mubr.bf16.mxu0 0
        %838 = vmatmul.mubr.bf16.gmra.mrb[0].mxu0 %v794
        %v839 = vpop.f32.mrb[0].mxu0
        %v840 = vadd.f32 0.0, %v839
        %v841 = vpop.f32.mrb[0].mxu0
        %v842 = vpop.f32.mrb[0].mxu0
        %v843 = vadd.f32 0.0, %v842
        %v844 = vpop.f32.mrb[0].mxu0
        %845 = vmatprep.mubr.bf16.mxu0 0
        %846 = vmatmul.mubr.bf16.gmra.mrb[0].mxu0 %v797
        %v847 = vpop.f32.mrb[0].mxu0
        %v848 = vadd.f32 0.0, %v847
        %v849 = vpop.f32.mrb[0].mxu0
        %v850 = vpop.f32.mrb[0].mxu0
        %v851 = vadd.f32 0.0, %v850
        %v852 = vpop.f32.mrb[0].mxu0
        %853 = vmatprep.mubr.bf16.mxu0 0
        %854 = vmatmul.mubr.bf16.gmra.mrb[0].mxu0 %v800
        %v855 = vpop.f32.mrb[0].mxu0
        %v856 = vadd.f32 0.0, %v855
        %v857 = vpop.f32.mrb[0].mxu0
        %v858 = vpop.f32.mrb[0].mxu0
        %v859 = vadd.f32 0.0, %v858
        %v860 = vpop.f32.mrb[0].mxu0
        %861 = vmatprep.mubr.bf16.mxu0 0
        %862 = vmatmul.mubr.bf16.gmra.mrb[0].mxu0 %v803
        %v863 = vpop.f32.mrb[0].mxu0
        %v864 = vadd.f32 0.0, %v863
        %v865 = vpop.f32.mrb[0].mxu0
        %v866 = vpop.f32.mrb[0].mxu0
        %v867 = vadd.f32 0.0, %v866
        %v868 = vpop.f32.mrb[0].mxu0
        %869 = vdwg.mxu0
        %v870 = vadd.f32 %v721, %v840
        %v871 = vadd.f32 %v722, %v843
        %v872 = vadd.f32 %v723, %v848
        %v873 = vadd.f32 %v724, %v851
        %v874 = vadd.f32 %v725, %v856
        %v875 = vadd.f32 %v726, %v859
        %v876 = vadd.f32 %v727, %v864
        %v877 = vadd.f32 %v728, %v867
        %s878 = sadd.s32 %s186, 54
        %s879 = smul.addr %s878, 4
        %s880 = scalar_lea.vmem %s182, %s879
        %v881 = vld [vmem:[%s880] sm:$0xf]
        %v882 = vld [vmem:[%s880 + $0x8] sm:$0xf]
        %v883 = vld [vmem:[%s880 + $0x10] sm:$0xf]
        %v884 = vld [vmem:[%s880 + $0x18] sm:$0xf]
        %v885 = vld [vmem:[%s880 + $0x20] sm:$0xf]
        %v886 = vld [vmem:[%s880 + $0x28] sm:$0xf]
        %v887 = vld [vmem:[%s880 + $0x30] sm:$0xf]
        %v888 = vld [vmem:[%s880 + $0x38] sm:$0xf]
        %s889 = scalar_lea.vmem %s1, 128
        %v890 = vld [vmem:[%s889] sm:$0xf]
        %v891 = vld [vmem:[%s889 + $0x4] sm:$0xf]
        %v892 = vld [vmem:[%s889 + $0x8] sm:$0xf]
        %v893 = vld [vmem:[%s889 + $0xc] sm:$0xf]
        %v894 = vld [vmem:[%s889 + $0x10] sm:$0xf]
        %v895 = vld [vmem:[%s889 + $0x14] sm:$0xf]
        %v896 = vld [vmem:[%s889 + $0x18] sm:$0xf]
        %v897 = vld [vmem:[%s889 + $0x1c] sm:$0xf]
        %v906 = vunpack.c.l.b16 %v881
        %v907 = vunpack.c.l.b16 %v882
        %v908 = vunpack.c.l.b16 %v883
        %v909 = vunpack.c.l.b16 %v884
        %v910 = vunpack.c.l.b16 %v885
        %v911 = vunpack.c.l.b16 %v886
        %v912 = vunpack.c.l.b16 %v887
        %v913 = vunpack.c.l.b16 %v888
        %v914 = vpack.c.b16 %v907, %v906
        %v915 = vpack.c.b16 %v909, %v908
        %v916 = vpack.c.b16 %v911, %v910
        %v917 = vpack.c.b16 %v913, %v912
        %v926 = vunpack.c.l.b16 %v890
        %v927 = vunpack.c.l.b16 %v891
        %v928 = vunpack.c.l.b16 %v892
        %v929 = vunpack.c.l.b16 %v893
        %v930 = vunpack.c.l.b16 %v894
        %v931 = vunpack.c.l.b16 %v895
        %v932 = vunpack.c.l.b16 %v896
        %v933 = vunpack.c.l.b16 %v897
        %v934 = vpack.c.b16 %v927, %v926
        %v935 = vpack.c.b16 %v929, %v928
        %v936 = vpack.c.b16 %v931, %v930
        %v937 = vpack.c.b16 %v933, %v932
        %v943 = vsel %vm269, %v914, 0
        %v946 = vsel %vm269, %v915, 0
        %v949 = vsel %vm269, %v916, 0
        %v952 = vsel %vm269, %v917, 0
        %954 = vmatprep.subr.bf16.mxu0 0
        %955 = vmatpush1.bf16.msra.mxu0 %v934
        %956 = vmatprep.subr.bf16.mxu0 0
        %957 = vmatpush1.bf16.msra.mxu0 %v935
        %958 = vmatprep.subr.bf16.mxu0 0
        %959 = vmatpush1.bf16.msra.mxu0 %v936
        %960 = vmatprep.subr.bf16.mxu0 0
        %961 = vmatpush1.bf16.msra.mxu0 %v937
        %962 = vmatprep.subr.bf16.mxu0 0
        %963 = vmatpush1.bf16.msra.mxu0 0
        %964 = vmatprep.subr.bf16.mxu0 0
        %965 = vmatpush1.bf16.msra.mxu0 0
        %966 = vmatprep.subr.bf16.mxu0 0
        %967 = vmatpush1.bf16.msra.mxu0 0
        %968 = vmatprep.subr.bf16.mxu0 0
        %969 = vmatpush1.bf16.msra.mxu0 0
        %970 = vmatprep.subr.bf16.mxu0 0
        %971 = vmatpush1.bf16.msra.mxu0 0
        %972 = vmatprep.subr.bf16.mxu0 0
        %973 = vmatpush1.bf16.msra.mxu0 0
        %974 = vmatprep.subr.bf16.mxu0 0
        %975 = vmatpush1.bf16.msra.mxu0 0
        %976 = vmatprep.subr.bf16.mxu0 0
        %977 = vmatpush1.bf16.msra.mxu0 0
        %978 = vmatprep.subr.bf16.mxu0 0
        %979 = vmatpush1.bf16.msra.mxu0 0
        %980 = vmatprep.subr.bf16.mxu0 0
        %981 = vmatpush1.bf16.msra.mxu0 0
        %982 = vmatprep.subr.bf16.mxu0 0
        %983 = vmatpush1.bf16.msra.mxu0 0
        %984 = vmatprep.subr.bf16.mxu0 0
        %985 = vmatpush1.bf16.msra.mxu0 0
        %986 = vmatprep.mubr.bf16.mxu0 0
        %987 = vmatmul.mubr.bf16.gmra.mrb[0].mxu0 %v943
        %v988 = vpop.f32.mrb[0].mxu0
        %v989 = vadd.f32 0.0, %v988
        %v990 = vpop.f32.mrb[0].mxu0
        %v991 = vpop.f32.mrb[0].mxu0
        %v992 = vadd.f32 0.0, %v991
        %v993 = vpop.f32.mrb[0].mxu0
        %994 = vmatprep.mubr.bf16.mxu0 0
        %995 = vmatmul.mubr.bf16.gmra.mrb[0].mxu0 %v946
        %v996 = vpop.f32.mrb[0].mxu0
        %v997 = vadd.f32 0.0, %v996
        %v998 = vpop.f32.mrb[0].mxu0
        %v999 = vpop.f32.mrb[0].mxu0
        %v1000 = vadd.f32 0.0, %v999
        %v1001 = vpop.f32.mrb[0].mxu0
        %1002 = vmatprep.mubr.bf16.mxu0 0
        %1003 = vmatmul.mubr.bf16.gmra.mrb[0].mxu0 %v949
        %v1004 = vpop.f32.mrb[0].mxu0
        %v1005 = vadd.f32 0.0, %v1004
        %v1006 = vpop.f32.mrb[0].mxu0
        %v1007 = vpop.f32.mrb[0].mxu0
        %v1008 = vadd.f32 0.0, %v1007
        %v1009 = vpop.f32.mrb[0].mxu0
        %1010 = vmatprep.mubr.bf16.mxu0 0
        %1011 = vmatmul.mubr.bf16.gmra.mrb[0].mxu0 %v952
        %v1012 = vpop.f32.mrb[0].mxu0
        %v1013 = vadd.f32 0.0, %v1012
        %v1014 = vpop.f32.mrb[0].mxu0
        %v1015 = vpop.f32.mrb[0].mxu0
        %v1016 = vadd.f32 0.0, %v1015
        %v1017 = vpop.f32.mrb[0].mxu0
        %1018 = vdwg.mxu0
        %v1019 = vadd.f32 %v870, %v989
        %v1020 = vadd.f32 %v871, %v992
        %v1021 = vadd.f32 %v872, %v997
        %v1022 = vadd.f32 %v873, %v1000
        %v1023 = vadd.f32 %v874, %v1005
        %v1024 = vadd.f32 %v875, %v1008
        %v1025 = vadd.f32 %v876, %v1013
        %v1026 = vadd.f32 %v877, %v1016
        %v1027 = vld [vmem:[%s731] sm:$0xf]
        %v1028 = vld [vmem:[%s731 + $0x4] sm:$0x1]
        %v1029 = vld [vmem:[%s731 + $0x8] sm:$0xf]
        %v1030 = vld [vmem:[%s731 + $0xc] sm:$0x1]
        %v1031 = vld [vmem:[%s731 + $0x10] sm:$0xf]
        %v1032 = vld [vmem:[%s731 + $0x14] sm:$0x1]
        %v1033 = vld [vmem:[%s731 + $0x18] sm:$0xf]
        %v1034 = vld [vmem:[%s731 + $0x1c] sm:$0x1]
        %v1035 = vld [vmem:[%s731 + $0x20] sm:$0xf]
        %v1036 = vld [vmem:[%s731 + $0x24] sm:$0x1]
        %v1037 = vld [vmem:[%s731 + $0x28] sm:$0xf]
        %v1038 = vld [vmem:[%s731 + $0x2c] sm:$0x1]
        %v1039 = vld [vmem:[%s731 + $0x30] sm:$0xf]
        %v1040 = vld [vmem:[%s731 + $0x34] sm:$0x1]
        %v1041 = vld [vmem:[%s731 + $0x38] sm:$0xf]
        %v1042 = vld [vmem:[%s731 + $0x3c] sm:$0x1]
        %v1044 = vshrl.u32 %v1027, 16
        %v1046 = vrot.slane %v1044, 4
        %v1047 = vshll.u32 %v1027, 16
        %v1049 = vrot.slane %v1047, 5
        %v1050 = vor.u32 %v1046, %v1049
        %v1051 = vrot.slane %v1050, 4
        %v1053 = vshll.u32 %v1028, 16
        %v1055 = vrot.slane %v1053, 5
        %v1056 = vsel %vm486, %v1051, %v1055
        %v1058 = vshrl.u32 %v1029, 16
        %v1060 = vrot.slane %v1058, 4
        %v1061 = vshll.u32 %v1029, 16
        %v1063 = vrot.slane %v1061, 5
        %v1064 = vor.u32 %v1060, %v1063
        %v1065 = vrot.slane %v1064, 4
        %v1067 = vshll.u32 %v1030, 16
        %v1069 = vrot.slane %v1067, 5
        %v1070 = vsel %vm486, %v1065, %v1069
        %v1072 = vshrl.u32 %v1031, 16
        %v1074 = vrot.slane %v1072, 4
        %v1075 = vshll.u32 %v1031, 16
        %v1077 = vrot.slane %v1075, 5
        %v1078 = vor.u32 %v1074, %v1077
        %v1079 = vrot.slane %v1078, 4
        %v1081 = vshll.u32 %v1032, 16
        %v1083 = vrot.slane %v1081, 5
        %v1084 = vsel %vm486, %v1079, %v1083
        %v1086 = vshrl.u32 %v1033, 16
        %v1088 = vrot.slane %v1086, 4
        %v1089 = vshll.u32 %v1033, 16
        %v1091 = vrot.slane %v1089, 5
        %v1092 = vor.u32 %v1088, %v1091
        %v1093 = vrot.slane %v1092, 4
        %v1095 = vshll.u32 %v1034, 16
        %v1097 = vrot.slane %v1095, 5
        %v1098 = vsel %vm486, %v1093, %v1097
        %v1100 = vshrl.u32 %v1035, 16
        %v1102 = vrot.slane %v1100, 4
        %v1103 = vshll.u32 %v1035, 16
        %v1105 = vrot.slane %v1103, 5
        %v1106 = vor.u32 %v1102, %v1105
        %v1107 = vrot.slane %v1106, 4
        %v1109 = vshll.u32 %v1036, 16
        %v1111 = vrot.slane %v1109, 5
        %v1112 = vsel %vm486, %v1107, %v1111
        %v1114 = vshrl.u32 %v1037, 16
        %v1116 = vrot.slane %v1114, 4
        %v1117 = vshll.u32 %v1037, 16
        %v1119 = vrot.slane %v1117, 5
        %v1120 = vor.u32 %v1116, %v1119
        %v1121 = vrot.slane %v1120, 4
        %v1123 = vshll.u32 %v1038, 16
        %v1125 = vrot.slane %v1123, 5
        %v1126 = vsel %vm486, %v1121, %v1125
        %v1128 = vshrl.u32 %v1039, 16
        %v1130 = vrot.slane %v1128, 4
        %v1131 = vshll.u32 %v1039, 16
        %v1133 = vrot.slane %v1131, 5
        %v1134 = vor.u32 %v1130, %v1133
        %v1135 = vrot.slane %v1134, 4
        %v1137 = vshll.u32 %v1040, 16
        %v1139 = vrot.slane %v1137, 5
        %v1140 = vsel %vm486, %v1135, %v1139
        %v1142 = vshrl.u32 %v1041, 16
        %v1144 = vrot.slane %v1142, 4
        %v1145 = vshll.u32 %v1041, 16
        %v1147 = vrot.slane %v1145, 5
        %v1148 = vor.u32 %v1144, %v1147
        %v1149 = vrot.slane %v1148, 4
        %v1151 = vshll.u32 %v1042, 16
        %v1153 = vrot.slane %v1151, 5
        %v1154 = vsel %vm486, %v1149, %v1153
        %s1155 = scalar_lea.vmem %s1, 160
        %v1156 = vld [vmem:[%s1155] sm:$0xf]
        %v1157 = vld [vmem:[%s1155 + $0x4] sm:$0xf]
        %v1158 = vld [vmem:[%s1155 + $0x8] sm:$0xf]
        %v1159 = vld [vmem:[%s1155 + $0xc] sm:$0xf]
        %v1160 = vld [vmem:[%s1155 + $0x10] sm:$0xf]
        %v1161 = vld [vmem:[%s1155 + $0x14] sm:$0xf]
        %v1162 = vld [vmem:[%s1155 + $0x18] sm:$0xf]
        %v1163 = vld [vmem:[%s1155 + $0x1c] sm:$0xf]
        %v1164 = vunpack.c.l.b16 %v1056
        %v1165 = vunpack.c.l.b16 %v1070
        %v1166 = vunpack.c.l.b16 %v1084
        %v1167 = vunpack.c.l.b16 %v1098
        %v1168 = vunpack.c.l.b16 %v1112
        %v1169 = vunpack.c.l.b16 %v1126
        %v1170 = vunpack.c.l.b16 %v1140
        %v1171 = vunpack.c.l.b16 %v1154
        %v1172 = vpack.c.b16 %v1165, %v1164
        %v1173 = vpack.c.b16 %v1167, %v1166
        %v1174 = vpack.c.b16 %v1169, %v1168
        %v1175 = vpack.c.b16 %v1171, %v1170
        %v1184 = vunpack.c.l.b16 %v1156
        %v1185 = vunpack.c.l.b16 %v1157
        %v1186 = vunpack.c.l.b16 %v1158
        %v1187 = vunpack.c.l.b16 %v1159
        %v1188 = vunpack.c.l.b16 %v1160
        %v1189 = vunpack.c.l.b16 %v1161
        %v1190 = vunpack.c.l.b16 %v1162
        %v1191 = vunpack.c.l.b16 %v1163
        %v1192 = vpack.c.b16 %v1185, %v1184
        %v1193 = vpack.c.b16 %v1187, %v1186
        %v1194 = vpack.c.b16 %v1189, %v1188
        %v1195 = vpack.c.b16 %v1191, %v1190
        %v1201 = vsel %vm269, %v1172, 0
        %v1204 = vsel %vm269, %v1173, 0
        %v1207 = vsel %vm269, %v1174, 0
        %v1210 = vsel %vm269, %v1175, 0
        %1212 = vmatprep.subr.bf16.mxu0 0
        %1213 = vmatpush1.bf16.msra.mxu0 %v1192
        %1214 = vmatprep.subr.bf16.mxu0 0
        %1215 = vmatpush1.bf16.msra.mxu0 %v1193
        %1216 = vmatprep.subr.bf16.mxu0 0
        %1217 = vmatpush1.bf16.msra.mxu0 %v1194
        %1218 = vmatprep.subr.bf16.mxu0 0
        %1219 = vmatpush1.bf16.msra.mxu0 %v1195
        %1220 = vmatprep.subr.bf16.mxu0 0
        %1221 = vmatpush1.bf16.msra.mxu0 0
        %1222 = vmatprep.subr.bf16.mxu0 0
        %1223 = vmatpush1.bf16.msra.mxu0 0
        %1224 = vmatprep.subr.bf16.mxu0 0
        %1225 = vmatpush1.bf16.msra.mxu0 0
        %1226 = vmatprep.subr.bf16.mxu0 0
        %1227 = vmatpush1.bf16.msra.mxu0 0
        %1228 = vmatprep.subr.bf16.mxu0 0
        %1229 = vmatpush1.bf16.msra.mxu0 0
        %1230 = vmatprep.subr.bf16.mxu0 0
        %1231 = vmatpush1.bf16.msra.mxu0 0
        %1232 = vmatprep.subr.bf16.mxu0 0
        %1233 = vmatpush1.bf16.msra.mxu0 0
        %1234 = vmatprep.subr.bf16.mxu0 0
        %1235 = vmatpush1.bf16.msra.mxu0 0
        %1236 = vmatprep.subr.bf16.mxu0 0
        %1237 = vmatpush1.bf16.msra.mxu0 0
        %1238 = vmatprep.subr.bf16.mxu0 0
        %1239 = vmatpush1.bf16.msra.mxu0 0
        %1240 = vmatprep.subr.bf16.mxu0 0
        %1241 = vmatpush1.bf16.msra.mxu0 0
        %1242 = vmatprep.subr.bf16.mxu0 0
        %1243 = vmatpush1.bf16.msra.mxu0 0
        %1244 = vmatprep.mubr.bf16.mxu0 0
        %1245 = vmatmul.mubr.bf16.gmra.mrb[0].mxu0 %v1201
        %v1246 = vpop.f32.mrb[0].mxu0
        %v1247 = vadd.f32 0.0, %v1246
        %v1248 = vpop.f32.mrb[0].mxu0
        %v1249 = vpop.f32.mrb[0].mxu0
        %v1250 = vadd.f32 0.0, %v1249
        %v1251 = vpop.f32.mrb[0].mxu0
        %1252 = vmatprep.mubr.bf16.mxu0 0
        %1253 = vmatmul.mubr.bf16.gmra.mrb[0].mxu0 %v1204
        %v1254 = vpop.f32.mrb[0].mxu0
        %v1255 = vadd.f32 0.0, %v1254
        %v1256 = vpop.f32.mrb[0].mxu0
        %v1257 = vpop.f32.mrb[0].mxu0
        %v1258 = vadd.f32 0.0, %v1257
        %v1259 = vpop.f32.mrb[0].mxu0
        %1260 = vmatprep.mubr.bf16.mxu0 0
        %1261 = vmatmul.mubr.bf16.gmra.mrb[0].mxu0 %v1207
        %v1262 = vpop.f32.mrb[0].mxu0
        %v1263 = vadd.f32 0.0, %v1262
        %v1264 = vpop.f32.mrb[0].mxu0
        %v1265 = vpop.f32.mrb[0].mxu0
        %v1266 = vadd.f32 0.0, %v1265
        %v1267 = vpop.f32.mrb[0].mxu0
        %1268 = vmatprep.mubr.bf16.mxu0 0
        %1269 = vmatmul.mubr.bf16.gmra.mrb[0].mxu0 %v1210
        %v1270 = vpop.f32.mrb[0].mxu0
        %v1271 = vadd.f32 0.0, %v1270
        %v1272 = vpop.f32.mrb[0].mxu0
        %v1273 = vpop.f32.mrb[0].mxu0
        %v1274 = vadd.f32 0.0, %v1273
        %v1275 = vpop.f32.mrb[0].mxu0
        %1276 = vdwg.mxu0
        %v1277 = vadd.f32 %v1019, %v1247
        %v1278 = vadd.f32 %v1020, %v1250
        %v1279 = vadd.f32 %v1021, %v1255
        %v1280 = vadd.f32 %v1022, %v1258
        %v1281 = vadd.f32 %v1023, %v1263
        %v1282 = vadd.f32 %v1024, %v1266
        %v1283 = vadd.f32 %v1025, %v1271
        %v1284 = vadd.f32 %v1026, %v1274
        %s1285 = sadd.s32 %s185, 1
        %s1286 = smul.u32 %s1285, 2
        %s1287 = smul.addr %s1286, 4
        %s1288 = scalar_lea.vmem %s182, %s1287
        %v1289 = vld [vmem:[%s1288] sm:$0xf]
        %v1290 = vld [vmem:[%s1288 + $0x8] sm:$0xf]
        %v1291 = vld [vmem:[%s1288 + $0x10] sm:$0xf]
        %v1292 = vld [vmem:[%s1288 + $0x18] sm:$0xf]
        %v1293 = vld [vmem:[%s1288 + $0x20] sm:$0xf]
        %v1294 = vld [vmem:[%s1288 + $0x28] sm:$0xf]
        %v1295 = vld [vmem:[%s1288 + $0x30] sm:$0xf]
        %v1296 = vld [vmem:[%s1288 + $0x38] sm:$0xf]
        %s1297 = scalar_lea.vmem %s1, 192
        %v1298 = vld [vmem:[%s1297] sm:$0xf]
        %v1299 = vld [vmem:[%s1297 + $0x4] sm:$0xf]
        %v1300 = vld [vmem:[%s1297 + $0x8] sm:$0xf]
        %v1301 = vld [vmem:[%s1297 + $0xc] sm:$0xf]
        %v1302 = vld [vmem:[%s1297 + $0x10] sm:$0xf]
        %v1303 = vld [vmem:[%s1297 + $0x14] sm:$0xf]
        %v1304 = vld [vmem:[%s1297 + $0x18] sm:$0xf]
        %v1305 = vld [vmem:[%s1297 + $0x1c] sm:$0xf]
        %v1314 = vunpack.c.l.b16 %v1289
        %v1315 = vunpack.c.l.b16 %v1290
        %v1316 = vunpack.c.l.b16 %v1291
        %v1317 = vunpack.c.l.b16 %v1292
        %v1318 = vunpack.c.l.b16 %v1293
        %v1319 = vunpack.c.l.b16 %v1294
        %v1320 = vunpack.c.l.b16 %v1295
        %v1321 = vunpack.c.l.b16 %v1296
        %v1322 = vpack.c.b16 %v1315, %v1314
        %v1323 = vpack.c.b16 %v1317, %v1316
        %v1324 = vpack.c.b16 %v1319, %v1318
        %v1325 = vpack.c.b16 %v1321, %v1320
        %v1334 = vunpack.c.l.b16 %v1298
        %v1335 = vunpack.c.l.b16 %v1299
        %v1336 = vunpack.c.l.b16 %v1300
        %v1337 = vunpack.c.l.b16 %v1301
        %v1338 = vunpack.c.l.b16 %v1302
        %v1339 = vunpack.c.l.b16 %v1303
        %v1340 = vunpack.c.l.b16 %v1304
        %v1341 = vunpack.c.l.b16 %v1305
        %v1342 = vpack.c.b16 %v1335, %v1334
        %v1343 = vpack.c.b16 %v1337, %v1336
        %v1344 = vpack.c.b16 %v1339, %v1338
        %v1345 = vpack.c.b16 %v1341, %v1340
        %v1351 = vsel %vm269, %v1322, 0
        %v1354 = vsel %vm269, %v1323, 0
        %v1357 = vsel %vm269, %v1324, 0
        %v1360 = vsel %vm269, %v1325, 0
        %1362 = vmatprep.subr.bf16.mxu0 0
        %1363 = vmatpush1.bf16.msra.mxu0 %v1342
        %1364 = vmatprep.subr.bf16.mxu0 0
        %1365 = vmatpush1.bf16.msra.mxu0 %v1343
        %1366 = vmatprep.subr.bf16.mxu0 0
        %1367 = vmatpush1.bf16.msra.mxu0 %v1344
        %1368 = vmatprep.subr.bf16.mxu0 0
        %1369 = vmatpush1.bf16.msra.mxu0 %v1345
        %1370 = vmatprep.subr.bf16.mxu0 0
        %1371 = vmatpush1.bf16.msra.mxu0 0
        %1372 = vmatprep.subr.bf16.mxu0 0
        %1373 = vmatpush1.bf16.msra.mxu0 0
        %1374 = vmatprep.subr.bf16.mxu0 0
        %1375 = vmatpush1.bf16.msra.mxu0 0
        %1376 = vmatprep.subr.bf16.mxu0 0
        %1377 = vmatpush1.bf16.msra.mxu0 0
        %1378 = vmatprep.subr.bf16.mxu0 0
        %1379 = vmatpush1.bf16.msra.mxu0 0
        %1380 = vmatprep.subr.bf16.mxu0 0
        %1381 = vmatpush1.bf16.msra.mxu0 0
        %1382 = vmatprep.subr.bf16.mxu0 0
        %1383 = vmatpush1.bf16.msra.mxu0 0
        %1384 = vmatprep.subr.bf16.mxu0 0
        %1385 = vmatpush1.bf16.msra.mxu0 0
        %1386 = vmatprep.subr.bf16.mxu0 0
        %1387 = vmatpush1.bf16.msra.mxu0 0
        %1388 = vmatprep.subr.bf16.mxu0 0
        %1389 = vmatpush1.bf16.msra.mxu0 0
        %1390 = vmatprep.subr.bf16.mxu0 0
        %1391 = vmatpush1.bf16.msra.mxu0 0
        %1392 = vmatprep.subr.bf16.mxu0 0
        %1393 = vmatpush1.bf16.msra.mxu0 0
        %1394 = vmatprep.mubr.bf16.mxu0 0
        %1395 = vmatmul.mubr.bf16.gmra.mrb[0].mxu0 %v1351
        %v1396 = vpop.f32.mrb[0].mxu0
        %v1397 = vadd.f32 0.0, %v1396
        %v1398 = vpop.f32.mrb[0].mxu0
        %v1399 = vpop.f32.mrb[0].mxu0
        %v1400 = vadd.f32 0.0, %v1399
        %v1401 = vpop.f32.mrb[0].mxu0
        %1402 = vmatprep.mubr.bf16.mxu0 0
        %1403 = vmatmul.mubr.bf16.gmra.mrb[0].mxu0 %v1354
        %v1404 = vpop.f32.mrb[0].mxu0
        %v1405 = vadd.f32 0.0, %v1404
        %v1406 = vpop.f32.mrb[0].mxu0
        %v1407 = vpop.f32.mrb[0].mxu0
        %v1408 = vadd.f32 0.0, %v1407
        %v1409 = vpop.f32.mrb[0].mxu0
        %1410 = vmatprep.mubr.bf16.mxu0 0
        %1411 = vmatmul.mubr.bf16.gmra.mrb[0].mxu0 %v1357
        %v1412 = vpop.f32.mrb[0].mxu0
        %v1413 = vadd.f32 0.0, %v1412
        %v1414 = vpop.f32.mrb[0].mxu0
        %v1415 = vpop.f32.mrb[0].mxu0
        %v1416 = vadd.f32 0.0, %v1415
        %v1417 = vpop.f32.mrb[0].mxu0
        %1418 = vmatprep.mubr.bf16.mxu0 0
        %1419 = vmatmul.mubr.bf16.gmra.mrb[0].mxu0 %v1360
        %v1420 = vpop.f32.mrb[0].mxu0
        %v1421 = vadd.f32 0.0, %v1420
        %v1422 = vpop.f32.mrb[0].mxu0
        %v1423 = vpop.f32.mrb[0].mxu0
        %v1424 = vadd.f32 0.0, %v1423
        %v1425 = vpop.f32.mrb[0].mxu0
        %1426 = vdwg.mxu0
        %v1427 = vadd.f32 %v1277, %v1397
        %v1428 = vadd.f32 %v1278, %v1400
        %v1429 = vadd.f32 %v1279, %v1405
        %v1430 = vadd.f32 %v1280, %v1408
        %v1431 = vadd.f32 %v1281, %v1413
        %v1432 = vadd.f32 %v1282, %v1416
        %v1433 = vadd.f32 %v1283, %v1421
        %v1434 = vadd.f32 %v1284, %v1424
        %s1435 = sadd.s32 %s1286, 18
        %s1436 = smul.addr %s1435, 4
        %s1437 = scalar_lea.vmem %s182, %s1436
        %v1438 = vld [vmem:[%s1437] sm:$0xf]
        %v1439 = vld [vmem:[%s1437 + $0x8] sm:$0xf]
        %v1440 = vld [vmem:[%s1437 + $0x10] sm:$0xf]
        %v1441 = vld [vmem:[%s1437 + $0x18] sm:$0xf]
        %v1442 = vld [vmem:[%s1437 + $0x20] sm:$0xf]
        %v1443 = vld [vmem:[%s1437 + $0x28] sm:$0xf]
        %v1444 = vld [vmem:[%s1437 + $0x30] sm:$0xf]
        %v1445 = vld [vmem:[%s1437 + $0x38] sm:$0xf]
        %s1446 = scalar_lea.vmem %s1, 224
        %v1447 = vld [vmem:[%s1446] sm:$0xf]
        %v1448 = vld [vmem:[%s1446 + $0x4] sm:$0xf]
        %v1449 = vld [vmem:[%s1446 + $0x8] sm:$0xf]
        %v1450 = vld [vmem:[%s1446 + $0xc] sm:$0xf]
        %v1451 = vld [vmem:[%s1446 + $0x10] sm:$0xf]
        %v1452 = vld [vmem:[%s1446 + $0x14] sm:$0xf]
        %v1453 = vld [vmem:[%s1446 + $0x18] sm:$0xf]
        %v1454 = vld [vmem:[%s1446 + $0x1c] sm:$0xf]
        %v1463 = vunpack.c.l.b16 %v1438
        %v1464 = vunpack.c.l.b16 %v1439
        %v1465 = vunpack.c.l.b16 %v1440
        %v1466 = vunpack.c.l.b16 %v1441
        %v1467 = vunpack.c.l.b16 %v1442
        %v1468 = vunpack.c.l.b16 %v1443
        %v1469 = vunpack.c.l.b16 %v1444
        %v1470 = vunpack.c.l.b16 %v1445
        %v1471 = vpack.c.b16 %v1464, %v1463
        %v1472 = vpack.c.b16 %v1466, %v1465
        %v1473 = vpack.c.b16 %v1468, %v1467
        %v1474 = vpack.c.b16 %v1470, %v1469
        %v1483 = vunpack.c.l.b16 %v1447
        %v1484 = vunpack.c.l.b16 %v1448
        %v1485 = vunpack.c.l.b16 %v1449
        %v1486 = vunpack.c.l.b16 %v1450
        %v1487 = vunpack.c.l.b16 %v1451
        %v1488 = vunpack.c.l.b16 %v1452
        %v1489 = vunpack.c.l.b16 %v1453
        %v1490 = vunpack.c.l.b16 %v1454
        %v1491 = vpack.c.b16 %v1484, %v1483
        %v1492 = vpack.c.b16 %v1486, %v1485
        %v1493 = vpack.c.b16 %v1488, %v1487
        %v1494 = vpack.c.b16 %v1490, %v1489
        %v1500 = vsel %vm269, %v1471, 0
        %v1503 = vsel %vm269, %v1472, 0
        %v1506 = vsel %vm269, %v1473, 0
        %v1509 = vsel %vm269, %v1474, 0
        %1511 = vmatprep.subr.bf16.mxu0 0
        %1512 = vmatpush1.bf16.msra.mxu0 %v1491
        %1513 = vmatprep.subr.bf16.mxu0 0
        %1514 = vmatpush1.bf16.msra.mxu0 %v1492
        %1515 = vmatprep.subr.bf16.mxu0 0
        %1516 = vmatpush1.bf16.msra.mxu0 %v1493
        %1517 = vmatprep.subr.bf16.mxu0 0
        %1518 = vmatpush1.bf16.msra.mxu0 %v1494
        %1519 = vmatprep.subr.bf16.mxu0 0
        %1520 = vmatpush1.bf16.msra.mxu0 0
        %1521 = vmatprep.subr.bf16.mxu0 0
        %1522 = vmatpush1.bf16.msra.mxu0 0
        %1523 = vmatprep.subr.bf16.mxu0 0
        %1524 = vmatpush1.bf16.msra.mxu0 0
        %1525 = vmatprep.subr.bf16.mxu0 0
        %1526 = vmatpush1.bf16.msra.mxu0 0
        %1527 = vmatprep.subr.bf16.mxu0 0
        %1528 = vmatpush1.bf16.msra.mxu0 0
        %1529 = vmatprep.subr.bf16.mxu0 0
        %1530 = vmatpush1.bf16.msra.mxu0 0
        %1531 = vmatprep.subr.bf16.mxu0 0
        %1532 = vmatpush1.bf16.msra.mxu0 0
        %1533 = vmatprep.subr.bf16.mxu0 0
        %1534 = vmatpush1.bf16.msra.mxu0 0
        %1535 = vmatprep.subr.bf16.mxu0 0
        %1536 = vmatpush1.bf16.msra.mxu0 0
        %1537 = vmatprep.subr.bf16.mxu0 0
        %1538 = vmatpush1.bf16.msra.mxu0 0
        %1539 = vmatprep.subr.bf16.mxu0 0
        %1540 = vmatpush1.bf16.msra.mxu0 0
        %1541 = vmatprep.subr.bf16.mxu0 0
        %1542 = vmatpush1.bf16.msra.mxu0 0
        %1543 = vmatprep.mubr.bf16.mxu0 0
        %1544 = vmatmul.mubr.bf16.gmra.mrb[0].mxu0 %v1500
        %v1545 = vpop.f32.mrb[0].mxu0
        %v1546 = vadd.f32 0.0, %v1545
        %v1547 = vpop.f32.mrb[0].mxu0
        %v1548 = vpop.f32.mrb[0].mxu0
        %v1549 = vadd.f32 0.0, %v1548
        %v1550 = vpop.f32.mrb[0].mxu0
        %1551 = vmatprep.mubr.bf16.mxu0 0
        %1552 = vmatmul.mubr.bf16.gmra.mrb[0].mxu0 %v1503
        %v1553 = vpop.f32.mrb[0].mxu0
        %v1554 = vadd.f32 0.0, %v1553
        %v1555 = vpop.f32.mrb[0].mxu0
        %v1556 = vpop.f32.mrb[0].mxu0
        %v1557 = vadd.f32 0.0, %v1556
        %v1558 = vpop.f32.mrb[0].mxu0
        %1559 = vmatprep.mubr.bf16.mxu0 0
        %1560 = vmatmul.mubr.bf16.gmra.mrb[0].mxu0 %v1506
        %v1561 = vpop.f32.mrb[0].mxu0
        %v1562 = vadd.f32 0.0, %v1561
        %v1563 = vpop.f32.mrb[0].mxu0
        %v1564 = vpop.f32.mrb[0].mxu0
        %v1565 = vadd.f32 0.0, %v1564
        %v1566 = vpop.f32.mrb[0].mxu0
        %1567 = vmatprep.mubr.bf16.mxu0 0
        %1568 = vmatmul.mubr.bf16.gmra.mrb[0].mxu0 %v1509
        %v1569 = vpop.f32.mrb[0].mxu0
        %v1570 = vadd.f32 0.0, %v1569
        %v1571 = vpop.f32.mrb[0].mxu0
        %v1572 = vpop.f32.mrb[0].mxu0
        %v1573 = vadd.f32 0.0, %v1572
        %v1574 = vpop.f32.mrb[0].mxu0
        %1575 = vdwg.mxu0
        %v1576 = vadd.f32 %v1427, %v1546
        %v1577 = vadd.f32 %v1428, %v1549
        %v1578 = vadd.f32 %v1429, %v1554
        %v1579 = vadd.f32 %v1430, %v1557
        %v1580 = vadd.f32 %v1431, %v1562
        %v1581 = vadd.f32 %v1432, %v1565
        %v1582 = vadd.f32 %v1433, %v1570
        %v1583 = vadd.f32 %v1434, %v1573
        %v1584 = vld [vmem:[%s1288] sm:$0xf]
        %v1585 = vld [vmem:[%s1288 + $0x4] sm:$0x1]
        %v1586 = vld [vmem:[%s1288 + $0x8] sm:$0xf]
        %v1587 = vld [vmem:[%s1288 + $0xc] sm:$0x1]
        %v1588 = vld [vmem:[%s1288 + $0x10] sm:$0xf]
        %v1589 = vld [vmem:[%s1288 + $0x14] sm:$0x1]
        %v1590 = vld [vmem:[%s1288 + $0x18] sm:$0xf]
        %v1591 = vld [vmem:[%s1288 + $0x1c] sm:$0x1]
        %v1592 = vld [vmem:[%s1288 + $0x20] sm:$0xf]
        %v1593 = vld [vmem:[%s1288 + $0x24] sm:$0x1]
        %v1594 = vld [vmem:[%s1288 + $0x28] sm:$0xf]
        %v1595 = vld [vmem:[%s1288 + $0x2c] sm:$0x1]
        %v1596 = vld [vmem:[%s1288 + $0x30] sm:$0xf]
        %v1597 = vld [vmem:[%s1288 + $0x34] sm:$0x1]
        %v1598 = vld [vmem:[%s1288 + $0x38] sm:$0xf]
        %v1599 = vld [vmem:[%s1288 + $0x3c] sm:$0x1]
        %v1601 = vshrl.u32 %v1584, 16
        %v1603 = vrot.slane %v1601, 4
        %v1604 = vshll.u32 %v1584, 16
        %v1606 = vrot.slane %v1604, 5
        %v1607 = vor.u32 %v1603, %v1606
        %v1608 = vrot.slane %v1607, 4
        %v1610 = vshll.u32 %v1585, 16
        %v1612 = vrot.slane %v1610, 5
        %v1613 = vsel %vm486, %v1608, %v1612
        %v1615 = vshrl.u32 %v1586, 16
        %v1617 = vrot.slane %v1615, 4
        %v1618 = vshll.u32 %v1586, 16
        %v1620 = vrot.slane %v1618, 5
        %v1621 = vor.u32 %v1617, %v1620
        %v1622 = vrot.slane %v1621, 4
        %v1624 = vshll.u32 %v1587, 16
        %v1626 = vrot.slane %v1624, 5
        %v1627 = vsel %vm486, %v1622, %v1626
        %v1629 = vshrl.u32 %v1588, 16
        %v1631 = vrot.slane %v1629, 4
        %v1632 = vshll.u32 %v1588, 16
        %v1634 = vrot.slane %v1632, 5
        %v1635 = vor.u32 %v1631, %v1634
        %v1636 = vrot.slane %v1635, 4
        %v1638 = vshll.u32 %v1589, 16
        %v1640 = vrot.slane %v1638, 5
        %v1641 = vsel %vm486, %v1636, %v1640
        %v1643 = vshrl.u32 %v1590, 16
        %v1645 = vrot.slane %v1643, 4
        %v1646 = vshll.u32 %v1590, 16
        %v1648 = vrot.slane %v1646, 5
        %v1649 = vor.u32 %v1645, %v1648
        %v1650 = vrot.slane %v1649, 4
        %v1652 = vshll.u32 %v1591, 16
        %v1654 = vrot.slane %v1652, 5
        %v1655 = vsel %vm486, %v1650, %v1654
        %v1657 = vshrl.u32 %v1592, 16
        %v1659 = vrot.slane %v1657, 4
        %v1660 = vshll.u32 %v1592, 16
        %v1662 = vrot.slane %v1660, 5
        %v1663 = vor.u32 %v1659, %v1662
        %v1664 = vrot.slane %v1663, 4
        %v1666 = vshll.u32 %v1593, 16
        %v1668 = vrot.slane %v1666, 5
        %v1669 = vsel %vm486, %v1664, %v1668
        %v1671 = vshrl.u32 %v1594, 16
        %v1673 = vrot.slane %v1671, 4
        %v1674 = vshll.u32 %v1594, 16
        %v1676 = vrot.slane %v1674, 5
        %v1677 = vor.u32 %v1673, %v1676
        %v1678 = vrot.slane %v1677, 4
        %v1680 = vshll.u32 %v1595, 16
        %v1682 = vrot.slane %v1680, 5
        %v1683 = vsel %vm486, %v1678, %v1682
        %v1685 = vshrl.u32 %v1596, 16
        %v1687 = vrot.slane %v1685, 4
        %v1688 = vshll.u32 %v1596, 16
        %v1690 = vrot.slane %v1688, 5
        %v1691 = vor.u32 %v1687, %v1690
        %v1692 = vrot.slane %v1691, 4
        %v1694 = vshll.u32 %v1597, 16
        %v1696 = vrot.slane %v1694, 5
        %v1697 = vsel %vm486, %v1692, %v1696
        %v1699 = vshrl.u32 %v1598, 16
        %v1701 = vrot.slane %v1699, 4
        %v1702 = vshll.u32 %v1598, 16
        %v1704 = vrot.slane %v1702, 5
        %v1705 = vor.u32 %v1701, %v1704
        %v1706 = vrot.slane %v1705, 4
        %v1708 = vshll.u32 %v1599, 16
        %v1710 = vrot.slane %v1708, 5
        %v1711 = vsel %vm486, %v1706, %v1710
        %s1712 = scalar_lea.vmem %s1, 256
        %v1713 = vld [vmem:[%s1712] sm:$0xf]
        %v1714 = vld [vmem:[%s1712 + $0x4] sm:$0xf]
        %v1715 = vld [vmem:[%s1712 + $0x8] sm:$0xf]
        %v1716 = vld [vmem:[%s1712 + $0xc] sm:$0xf]
        %v1717 = vld [vmem:[%s1712 + $0x10] sm:$0xf]
        %v1718 = vld [vmem:[%s1712 + $0x14] sm:$0xf]
        %v1719 = vld [vmem:[%s1712 + $0x18] sm:$0xf]
        %v1720 = vld [vmem:[%s1712 + $0x1c] sm:$0xf]
        %v1721 = vunpack.c.l.b16 %v1613
        %v1722 = vunpack.c.l.b16 %v1627
        %v1723 = vunpack.c.l.b16 %v1641
        %v1724 = vunpack.c.l.b16 %v1655
        %v1725 = vunpack.c.l.b16 %v1669
        %v1726 = vunpack.c.l.b16 %v1683
        %v1727 = vunpack.c.l.b16 %v1697
        %v1728 = vunpack.c.l.b16 %v1711
        %v1729 = vpack.c.b16 %v1722, %v1721
        %v1730 = vpack.c.b16 %v1724, %v1723
        %v1731 = vpack.c.b16 %v1726, %v1725
        %v1732 = vpack.c.b16 %v1728, %v1727
        %v1741 = vunpack.c.l.b16 %v1713
        %v1742 = vunpack.c.l.b16 %v1714
        %v1743 = vunpack.c.l.b16 %v1715
        %v1744 = vunpack.c.l.b16 %v1716
        %v1745 = vunpack.c.l.b16 %v1717
        %v1746 = vunpack.c.l.b16 %v1718
        %v1747 = vunpack.c.l.b16 %v1719
        %v1748 = vunpack.c.l.b16 %v1720
        %v1749 = vpack.c.b16 %v1742, %v1741
        %v1750 = vpack.c.b16 %v1744, %v1743
        %v1751 = vpack.c.b16 %v1746, %v1745
        %v1752 = vpack.c.b16 %v1748, %v1747
        %v1758 = vsel %vm269, %v1729, 0
        %v1761 = vsel %vm269, %v1730, 0
        %v1764 = vsel %vm269, %v1731, 0
        %v1767 = vsel %vm269, %v1732, 0
        %1769 = vmatprep.subr.bf16.mxu0 0
        %1770 = vmatpush1.bf16.msra.mxu0 %v1749
        %1771 = vmatprep.subr.bf16.mxu0 0
        %1772 = vmatpush1.bf16.msra.mxu0 %v1750
        %1773 = vmatprep.subr.bf16.mxu0 0
        %1774 = vmatpush1.bf16.msra.mxu0 %v1751
        %1775 = vmatprep.subr.bf16.mxu0 0
        %1776 = vmatpush1.bf16.msra.mxu0 %v1752
        %1777 = vmatprep.subr.bf16.mxu0 0
        %1778 = vmatpush1.bf16.msra.mxu0 0
        %1779 = vmatprep.subr.bf16.mxu0 0
        %1780 = vmatpush1.bf16.msra.mxu0 0
        %1781 = vmatprep.subr.bf16.mxu0 0
        %1782 = vmatpush1.bf16.msra.mxu0 0
        %1783 = vmatprep.subr.bf16.mxu0 0
        %1784 = vmatpush1.bf16.msra.mxu0 0
        %1785 = vmatprep.subr.bf16.mxu0 0
        %1786 = vmatpush1.bf16.msra.mxu0 0
        %1787 = vmatprep.subr.bf16.mxu0 0
        %1788 = vmatpush1.bf16.msra.mxu0 0
        %1789 = vmatprep.subr.bf16.mxu0 0
        %1790 = vmatpush1.bf16.msra.mxu0 0
        %1791 = vmatprep.subr.bf16.mxu0 0
        %1792 = vmatpush1.bf16.msra.mxu0 0
        %1793 = vmatprep.subr.bf16.mxu0 0
        %1794 = vmatpush1.bf16.msra.mxu0 0
        %1795 = vmatprep.subr.bf16.mxu0 0
        %1796 = vmatpush1.bf16.msra.mxu0 0
        %1797 = vmatprep.subr.bf16.mxu0 0
        %1798 = vmatpush1.bf16.msra.mxu0 0
        %1799 = vmatprep.subr.bf16.mxu0 0
        %1800 = vmatpush1.bf16.msra.mxu0 0
        %1801 = vmatprep.mubr.bf16.mxu0 0
        %1802 = vmatmul.mubr.bf16.gmra.mrb[0].mxu0 %v1758
        %v1803 = vpop.f32.mrb[0].mxu0
        %v1804 = vadd.f32 0.0, %v1803
        %v1805 = vpop.f32.mrb[0].mxu0
        %v1806 = vpop.f32.mrb[0].mxu0
        %v1807 = vadd.f32 0.0, %v1806
        %v1808 = vpop.f32.mrb[0].mxu0
        %1809 = vmatprep.mubr.bf16.mxu0 0
        %1810 = vmatmul.mubr.bf16.gmra.mrb[0].mxu0 %v1761
        %v1811 = vpop.f32.mrb[0].mxu0
        %v1812 = vadd.f32 0.0, %v1811
        %v1813 = vpop.f32.mrb[0].mxu0
        %v1814 = vpop.f32.mrb[0].mxu0
        %v1815 = vadd.f32 0.0, %v1814
        %v1816 = vpop.f32.mrb[0].mxu0
        %1817 = vmatprep.mubr.bf16.mxu0 0
        %1818 = vmatmul.mubr.bf16.gmra.mrb[0].mxu0 %v1764
        %v1819 = vpop.f32.mrb[0].mxu0
        %v1820 = vadd.f32 0.0, %v1819
        %v1821 = vpop.f32.mrb[0].mxu0
        %v1822 = vpop.f32.mrb[0].mxu0
        %v1823 = vadd.f32 0.0, %v1822
        %v1824 = vpop.f32.mrb[0].mxu0
        %1825 = vmatprep.mubr.bf16.mxu0 0
        %1826 = vmatmul.mubr.bf16.gmra.mrb[0].mxu0 %v1767
        %v1827 = vpop.f32.mrb[0].mxu0
        %v1828 = vadd.f32 0.0, %v1827
        %v1829 = vpop.f32.mrb[0].mxu0
        %v1830 = vpop.f32.mrb[0].mxu0
        %v1831 = vadd.f32 0.0, %v1830
        %v1832 = vpop.f32.mrb[0].mxu0
        %1833 = vdwg.mxu0
        %v1834 = vadd.f32 %v1576, %v1804
        %v1835 = vadd.f32 %v1577, %v1807
        %v1836 = vadd.f32 %v1578, %v1812
        %v1837 = vadd.f32 %v1579, %v1815
        %v1838 = vadd.f32 %v1580, %v1820
        %v1839 = vadd.f32 %v1581, %v1823
        %v1840 = vadd.f32 %v1582, %v1828
        %v1841 = vadd.f32 %v1583, %v1831
        %v1842 = vld [vmem:[%s2] sm:$0x1]
        %v1844 = vlaneseq
        %v1845 = vshrl.u32 %v1844, 7
        %v1846 = vsub.s32 0, %v1845
        %v1847 = vrot.slane %v1842, %v1846
        %v1849 = vadd.f32 %v1834, %v1847
        %v1850 = vadd.f32 %v1835, %v1847
        %v1851 = vadd.f32 %v1836, %v1847
        %v1852 = vadd.f32 %v1837, %v1847
        %v1853 = vadd.f32 %v1838, %v1847
        %v1854 = vadd.f32 %v1839, %v1847
        %v1855 = vadd.f32 %v1840, %v1847
        %v1856 = vadd.f32 %v1841, %v1847
        %1857 = vst.msk [vmem:[%s177] sm:$0xff] %vm269, %v1849
        %1858 = vst.msk [vmem:[%s177 + $0x8] sm:$0xff] %vm269, %v1850
        %1859 = vst.msk [vmem:[%s177 + $0x10] sm:$0xff] %vm269, %v1851
        %1860 = vst.msk [vmem:[%s177 + $0x18] sm:$0xff] %vm269, %v1852
        %1861 = vst.msk [vmem:[%s177 + $0x20] sm:$0xff] %vm269, %v1853
        %1862 = vst.msk [vmem:[%s177 + $0x28] sm:$0xff] %vm269, %v1854
        %1863 = vst.msk [vmem:[%s177 + $0x30] sm:$0xff] %vm269, %v1855
        %1864 = vst.msk [vmem:[%s177 + $0x38] sm:$0xff] %vm269, %v1856
        %s1865 = sand.u32 %s107, 1
        %s1866 = scalar_lea.sflag [#allocation3], %s1865
        %s1867 = sand.u32 %s107, 1
        %s1868 = smul.addr %s1867, 64
        %s1869 = scalar_lea.vmem [#allocation2], %s1868
        // Predicated region
        $region33: #{tpu_custom_call.1} parent=31 // pred_check
          %p1870 = pneg %p117
        $region34: #{tpu_custom_call.1} parent=31 // pred_check_branch
          %1872 = sbr.rel (%p1870) target = $region36
        $region35: #{tpu_custom_call.1} parent=31 // pred_region
          %s1873 = smul.u32 8, %s22
          %s1875 = ssub.s32 1024, 1024
          %1876 = vsyncadd %s1866, %s1875
          %s1877 = smul.addr %s21, 8
          %s1878 = sadd.s32 %s1873, %s1877
          %s1879 = smul.addr %s1878, 128
          %s1880 = scalar_lea.hbm %s3, %s1879
          %s1881 = sshll.u32 %s1869, 4
          %s1882 = int_to_ptr.vmem [resolvable:$true] %s1881
          %1887 = dma.vmem_to_hbm [thread:$0]  %s1882, 1024, %s1880, %s1866, 128, 128, 8
        $region36: #{tpu_custom_call.1} parent=31 // pred_fallthru
          _
      $region32: #{tpu_custom_call.1} parent=5 // pred_fallthru
        _
      %p1888 = scmp.le.s32.totalorder 2, %s12
      // Predicated region
      $region37: #{tpu_custom_call.1} parent=5 // pred_check
        %p1889 = pneg %p1888
      $region38: #{tpu_custom_call.1} parent=5 // pred_check_branch
        %1891 = sbr.rel (%p1889) target = $region40
      $region39: #{tpu_custom_call.1} parent=5 // pred_region
        %s1892 = ssub.s32 %s12, 2
        // Predicated region
        $region41: #{tpu_custom_call.1} parent=39 // pred_check
          %p1893 = pneg %p123
        $region42: #{tpu_custom_call.1} parent=39 // pred_check_branch
          %1895 = sbr.rel (%p1893) target = $region44
        $region43: #{tpu_custom_call.1} parent=39 // pred_region
          %s1896 = sand.u32 %s108, 1
          %s1897 = scalar_lea.sflag [#allocation3], %s1896
          %s1898 = sand.u32 %s108, 1
          %s1899 = smul.addr %s1898, 64
          %s1900 = scalar_lea.vmem [#allocation2], %s1899
          %1901 = dma.done %s1897, 1024
        $region44: #{tpu_custom_call.1} parent=39 // pred_fallthru
          _
      $region40: #{tpu_custom_call.1} parent=5 // pred_fallthru
        _
    $region6: #{tpu_custom_call.1} parent=1 // loop_footer
      %s16 = sadd.s32 1, %s12
    $region7: #{tpu_custom_call.1} parent=1 // loop_footer_branch
      %11 = sbr.rel target = $region3
    $region8: #{tpu_custom_call.1} parent=1 // loop_exit
      _
    %1902 = vsyncpa [#allocation3], 1
    %s1903 = scalar_lea.sflag [#allocation3], 1
    %1904 = vsyncpa %s1903, 1

</llo_original>
